<compile_context>
chip_gen: v5e
topology: v5e:2x2
jax: 0.10.0
libtpu: 0.0.40
codegen_flags: <defaults>
</compile_context>

<pallas_src>
import jax
import jax.numpy as jnp
from jax.experimental import pallas as pl
from jax.experimental.pallas import tpu as pltpu

# ----------------------------- config ---------------------------------------
IN_CHANNELS = 8
OUT_DIRGNN = 16
NUM_LAYERS_DIRGNN = 2
OUT_GATV2 = 8
HEADS = 2
ALPHA = 0.5
NEG_SLOPE = 0.2
PRED_HIDDEN = 32
NUM_OUTPUTS = 3

N_PER_GRAPH = 12
NUM_GRAPHS = 2
N = N_PER_GRAPH * NUM_GRAPHS

HC = HEADS * OUT_GATV2                                   # 16
DIRGNN_D_INS = tuple([IN_CHANNELS] + [OUT_DIRGNN] * (NUM_LAYERS_DIRGNN - 1))

CHUNK = 8                       # destination rows processed per attention step
assert N % CHUNK == 0

SLAB_W = 32                     # lane width of the packed static slab


# ------------------------- static slab layout -------------------------------
def _build_layout():
    lay, r = {}, 0

    def alloc(name, rows):
        nonlocal r
        lay[name] = r
        r += ((rows + 7) // 8) * 8          # 8-row aligned segments

    alloc("m_in", N)                        # (1 - alpha) * GCN operator (orig edges)
    alloc("m_out", N)                       # alpha * GCN operator (flipped edges)
    alloc("adj", N)                         # GAT adjacency mask (incl. self loops)
    alloc("emat", N)                        # dense edge-attr matrix
    alloc("pool", NUM_GRAPHS)               # mean-pool matrix [G, N]
    for li, d_in in enumerate(DIRGNN_D_INS):
        alloc(f"w_in{li}", d_in)
        alloc(f"w_out{li}", d_in)
    alloc("wl", IN_CHANNELS)                # GATv2 lin_l
    alloc("wr", IN_CHANNELS)                # GATv2 lin_r
    alloc("w1a", OUT_DIRGNN)                # projector1 (DirGNN half)
    alloc("w1b", HC)                        # projector1 (GATv2 half)
    alloc("w2", PRED_HIDDEN)                # projector2
    vec_names = ([f"b_mix{li}" for li in range(NUM_LAYERS_DIRGNN)]
                 + ["bl", "br", "we", "gbias", "b1", "b2"]
                 + [f"att{h}" for h in range(HEADS)]
                 + [f"mask{h}" for h in range(HEADS)])
    lay["vec_rows"] = {nm: i for i, nm in enumerate(vec_names)}
    alloc("vec", len(vec_names))            # 1-row vectors, one per sublane
    lay["_rows"] = r
    return lay


LAYOUT = _build_layout()


# --------------------- fused forward-pass kernel ----------------------------
def _fused_kernel(x_ref, slab_ref, o_ref):
    lay = LAYOUT

    def blk(name, rows, width):
        r = lay[name]
        return slab_ref[r:r + rows, 0:width]

    def vec(name, width):
        r = lay["vec"] + lay["vec_rows"][name]
        return slab_ref[r:r + 1, 0:width]

    x = x_ref[...]                                           # [N, F]

    # ---------------- DirGNN branch (4 small dots / layer, no relayouts) -----
    m_in = blk("m_in", N, N)                                 # pre-scaled by (1-a)
    m_out = blk("m_out", N, N)                               # pre-scaled by a
    x1 = x
    for li, d_in in enumerate(DIRGNN_D_INS):
        w_in = blk(f"w_in{li}", d_in, OUT_DIRGNN)
        w_out = blk(f"w_out{li}", d_in, OUT_DIRGNN)
        h = (jnp.dot(m_in, jnp.dot(x1, w_in, preferred_element_type=jnp.float32),
                     preferred_element_type=jnp.float32)
             + jnp.dot(m_out, jnp.dot(x1, w_out, preferred_element_type=jnp.float32),
                       preferred_element_type=jnp.float32)
             + vec(f"b_mix{li}", OUT_DIRGNN))
        x1 = jnp.maximum(h, 0.0)             # ReLU; dropout = identity (eval mode)

    # ---------------- GATv2 branch, chunked over destination rows ------------
    wl = blk("wl", IN_CHANNELS, HC)
    wr = blk("wr", IN_CHANNELS, HC)
    xl = jnp.dot(x, wl, preferred_element_type=jnp.float32) + vec("bl", HC)   # [N, HC]
    xr = jnp.dot(x, wr, preferred_element_type=jnp.float32) + vec("br", HC)   # [N, HC]
    we = vec("we", HC)                                       # [1, HC]
    att_m = [vec(f"att{h}", HC) for h in range(HEADS)]       # att, other head zeroed
    # value inputs with the other head's lanes zeroed -> per-head matmuls sum
    # straight into the concatenated x2 (no lane concat of head outputs).
    xl_val = [xl * vec(f"mask{h}", HC) for h in range(HEADS)]

    x2_chunks = []
    for c0 in range(0, N, CHUNK):
        xr_c = xr[c0:c0 + CHUNK]                                             # [8, HC]
        em_c = slab_ref[lay["emat"] + c0:lay["emat"] + c0 + CHUNK, 0:N]      # [8, N]
        adj_c = slab_ref[lay["adj"] + c0:lay["adj"] + c0 + CHUNK, 0:N]       # [8, N]
        # only an [8, N, HC] (24-vreg) tile is live at any point
        t = xl[None, :, :] + xr_c[:, None, :] + em_c[:, :, None] * we[None, :, :]
        t = jnp.where(t > 0, t, NEG_SLOPE * t)                               # leaky_relu
        out_c = jnp.zeros((CHUNK, HC), jnp.float32)
        for hd in range(HEADS):
            s = jnp.sum(t * att_m[hd][None, :, :], axis=-1)                  # [8, N]
            s = jnp.where(adj_c > 0, s, jnp.float32(-1e30))
            s = s - jnp.max(s, axis=1, keepdims=True)
            e = jnp.where(adj_c > 0, jnp.exp(s), 0.0)        # robust if a row is empty
            # approx=True would add ~1e-3 rel. error (review caveat) -> keep exact
            inv = pl.reciprocal(jnp.sum(e, axis=1, keepdims=True), approx=False)
            out_c = out_c + jnp.dot(e * inv, xl_val[hd],
                                    preferred_element_type=jnp.float32)      # [8, HC]
        x2_chunks.append(out_c)
    x2 = jnp.concatenate(x2_chunks, axis=0) + vec("gbias", HC)   # sublane concat only

    # ---------------- mean-pool both branches + MLP head ---------------------
    pool = blk("pool", NUM_GRAPHS, N)                                        # [G, N]
    p1 = jnp.dot(pool, x1, preferred_element_type=jnp.float32)               # [G, dh]
    p2 = jnp.dot(pool, x2, preferred_element_type=jnp.float32)               # [G, HC]
    hdn = jnp.maximum(
        jnp.dot(p1, blk("w1a", OUT_DIRGNN, PRED_HIDDEN), preferred_element_type=jnp.float32)
        + jnp.dot(p2, blk("w1b", HC, PRED_HIDDEN), preferred_element_type=jnp.float32)
        + vec("b1", PRED_HIDDEN), 0.0)                                        # [G, hidden]
    o_ref[...] = (jnp.dot(hdn, blk("w2", PRED_HIDDEN, NUM_OUTPUTS),
                          preferred_element_type=jnp.float32)
                  + vec("b2", NUM_OUTPUTS))                                   # [G, out]


@jax.jit
def fused_forward(x, slab):
    vm = pl.BlockSpec(memory_space=pltpu.MemorySpace.VMEM)
    cost = pl.CostEstimate(
        flops=250_000,                                  # tiny, latency-bound kernel
        transcendentals=HEADS * N * N,                  # exp() count
        bytes_accessed=int(4 * (x.size + slab.size + NUM_GRAPHS * NUM_OUTPUTS)),
    )
    return pl.pallas_call(
        _fused_kernel,
        out_shape=jax.ShapeDtypeStruct((NUM_GRAPHS, NUM_OUTPUTS), jnp.float32),
        in_specs=[vm, vm],
        out_specs=vm,
        cost_estimate=cost,
    )(x, slab)


# -------------------------- graph preprocessing (one-time glue) -------------
def dense_gcn_operator(src, dst, n):
    """D^-1/2 (A + I) D^-1/2 with A[dst, src] = 1."""
    a = jnp.zeros((n, n), jnp.float32).at[dst, src].add(1.0)
    a_hat = a + jnp.eye(n, dtype=jnp.float32)
    deg = a_hat.sum(axis=1)
    dinv = jnp.where(deg > 0, 1.0 / jnp.sqrt(deg), 0.0)
    return dinv[:, None] * a_hat * dinv[None, :]


def dense_gat_graph(src, dst, edge_attr, n):
    """Adjacency mask + dense edge-attr matrix (self loops with attr=1.0)."""
    eye = jnp.eye(n, dtype=jnp.float32)
    adj = jnp.zeros((n, n), jnp.float32).at[dst, src].set(1.0)
    emat = jnp.zeros((n, n), jnp.float32).at[dst, src].set(edge_attr[:, 0])
    adj = jnp.maximum(adj * (1.0 - eye), eye)   # remove + re-add self loops
    emat = emat * (1.0 - eye) + eye * 1.0       # fill_value = 1.0
    return adj, emat


# -------------------- one-time static slab packing (hoisted) ----------------
def pack_static_slab(params, m_in, m_out, adj, emat, pool):
    """Graph/parameter-static: run once, reuse for every forward call."""
    lay = LAYOUT
    slab = jnp.zeros((lay["_rows"], SLAB_W), jnp.float32)

    def put(s, name, arr):
        arr = jnp.asarray(arr, jnp.float32)
        r = lay[name]
        return s.at[r:r + arr.shape[0], 0:arr.shape[1]].set(arr)

    def putv(s, name, arr):
        arr = jnp.asarray(arr, jnp.float32).reshape(1, -1)
        r = lay["vec"] + lay["vec_rows"][name]
        return s.at[r:r + 1, 0:arr.shape[1]].set(arr)

    slab = put(slab, "m_in", (1.0 - ALPHA) * m_in)
    slab = put(slab, "m_out", ALPHA * m_out)
    slab = put(slab, "adj", adj)
    slab = put(slab, "emat", emat)
    slab = put(slab, "pool", pool)
    for li, lp in enumerate(params["dirgnn"]):
        slab = put(slab, f"w_in{li}", lp["w_in"])
        slab = put(slab, f"w_out{li}", lp["w_out"])
        slab = putv(slab, f"b_mix{li}",
                    (1.0 - ALPHA) * lp["b_in"] + ALPHA * lp["b_out"])
    assert len(params["gat"]) == 1, "fused kernel implements num_layers_GATv2 == 1"
    gp = params["gat"][0]
    slab = put(slab, "wl", gp["wl"])
    slab = put(slab, "wr", gp["wr"])
    slab = putv(slab, "bl", gp["bl"])
    slab = putv(slab, "br", gp["br"])
    slab = putv(slab, "we", gp["we"])
    slab = putv(slab, "gbias", gp["bias"])
    for h in range(HEADS):
        mask = jnp.zeros((1, HC), jnp.float32).at[0, h * OUT_GATV2:(h + 1) * OUT_GATV2].set(1.0)
        slab = putv(slab, f"mask{h}", mask)
        slab = putv(slab, f"att{h}", gp["att"] * mask)
    hp = params["head"]
    slab = put(slab, "w1a", hp["w1a"])
    slab = put(slab, "w1b", hp["w1b"])
    slab = put(slab, "w2", hp["w2"])
    slab = putv(slab, "b1", hp["b1"])
    slab = putv(slab, "b2", hp["b2"])
    return slab


# -------------------------- pure-JAX reference ------------------------------
def model_forward_ref(params, x, m_in, m_out, adj, emat, pool):
    x1 = x
    for lp in params["dirgnn"]:
        h_in = m_in @ (x1 @ lp["w_in"]) + lp["b_in"]
        h_out = m_out @ (x1 @ lp["w_out"]) + lp["b_out"]
        x1 = jnp.maximum(ALPHA * h_out + (1.0 - ALPHA) * h_in, 0.0)
    for lp in params["gat"]:
        xl = x @ lp["wl"] + lp["bl"]
        xr = x @ lp["wr"] + lp["br"]
        outs = []
        for h in range(HEADS):
            sl = slice(h * OUT_GATV2, (h + 1) * OUT_GATV2)
            t = (xl[None, :, sl] + xr[:, None, sl]
                 + emat[:, :, None] * lp["we"][0, sl][None, None, :])
            t = jnp.where(t > 0, t, NEG_SLOPE * t)
            s = (t * lp["att"][0, sl][None, None, :]).sum(-1)
            s = jnp.where(adj > 0, s, -1e30)
            s = s - s.max(axis=1, keepdims=True)
            e = jnp.where(adj > 0, jnp.exp(s), 0.0)
            a = e / e.sum(axis=1, keepdims=True)
            outs.append(a @ xl[:, sl])
        x2 = jnp.concatenate(outs, axis=-1) + lp["bias"]
    p1 = pool @ x1
    p2 = pool @ x2
    hp = params["head"]
    h = jnp.maximum(p1 @ hp["w1a"] + p2 @ hp["w1b"] + hp["b1"], 0.0)
    return h @ hp["w2"] + hp["b2"]


# ------------------------------- main ----------------------------------------
if __name__ == "__main__":
    key = jax.random.PRNGKey(0)

    def nrm(k, shape, scale=0.3):
        return (scale * jax.random.normal(k, shape)).astype(jnp.float32)

    keys = iter(jax.random.split(key, 64))

    # --- node features, edges, edge attrs, batch vector ---
    x = nrm(next(keys), (N, IN_CHANNELS), 1.0)
    src_list, dst_list = [], []
    for g in range(NUM_GRAPHS):
        o = g * N_PER_GRAPH
        for i in range(N_PER_GRAPH):
            src_list += [o + i, o + i]
            dst_list += [o + (i + 1) % N_PER_GRAPH, o + (i + 3) % N_PER_GRAPH]
    src = jnp.array(src_list, jnp.int32)
    dst = jnp.array(dst_list, jnp.int32)
    edge_attr = jnp.abs(nrm(next(keys), (src.shape[0], 1), 1.0))
    batch = jnp.repeat(jnp.arange(NUM_GRAPHS), N_PER_GRAPH)

    # --- deterministic parameter init ---
    params = {"dirgnn": [], "gat": [], "head": {}}
    d_in = IN_CHANNELS
    for _ in range(NUM_LAYERS_DIRGNN):
        params["dirgnn"].append(dict(
            w_in=nrm(next(keys), (d_in, OUT_DIRGNN)),
            b_in=nrm(next(keys), (1, OUT_DIRGNN), 0.05),
            w_out=nrm(next(keys), (d_in, OUT_DIRGNN)),
            b_out=nrm(next(keys), (1, OUT_DIRGNN), 0.05),
        ))
        d_in = OUT_DIRGNN
    params["gat"].append(dict(
        wl=nrm(next(keys), (IN_CHANNELS, HC)),
        bl=nrm(next(keys), (1, HC), 0.05),
        wr=nrm(next(keys), (IN_CHANNELS, HC)),
        br=nrm(next(keys), (1, HC), 0.05),
        we=nrm(next(keys), (1, HC)),            # lin_edge weight (edge_dim=1)
        att=nrm(next(keys), (1, HC)),           # attention vector, per-head slices
        bias=nrm(next(keys), (1, HC), 0.05),
    ))
    params["head"] = dict(
        w1a=nrm(next(keys), (OUT_DIRGNN, PRED_HIDDEN)),
        w1b=nrm(next(keys), (HC, PRED_HIDDEN)),
        b1=nrm(next(keys), (1, PRED_HIDDEN), 0.05),
        w2=nrm(next(keys), (PRED_HIDDEN, NUM_OUTPUTS)),
        b2=nrm(next(keys), (1, NUM_OUTPUTS), 0.05),
    )

    # --- graph/parameter-static preprocessing, hoisted & done ONCE ---
    m_in = dense_gcn_operator(src, dst, N)                # conv_in (orig edges)
    m_out = dense_gcn_operator(dst, src, N)               # conv_out (flipped)
    adj, emat = dense_gat_graph(src, dst, edge_attr, N)
    counts = jnp.zeros((NUM_GRAPHS,)).at[batch].add(1.0)
    pool = (jax.nn.one_hot(batch, NUM_GRAPHS, dtype=jnp.float32).T
            / counts[:, None])                            # global mean pool
    slab = jax.block_until_ready(pack_static_slab(params, m_in, m_out, adj, emat, pool))

    # --- per-step work: a single pallas_call with 2 input DMAs ---
    out = fused_forward(x, slab)
    out = jax.block_until_ready(out)

    ref = model_forward_ref(params, x, m_in, m_out, adj, emat, pool)
    assert out.shape == (NUM_GRAPHS, NUM_OUTPUTS), out.shape
    assert jnp.allclose(out, ref, atol=2e-4, rtol=2e-4), (out, ref)
    print("KERNEL_OK")
</pallas_src>

<mosaic_0001>
module attributes {stable_mosaic.version = 11 : i64} {
  func.func @_fused_kernel(%arg0: memref<24x8xf32, #tpu.memory_space<vmem>>, %arg1: memref<248x32xf32, #tpu.memory_space<vmem>>, %arg2: memref<2x3xf32, #tpu.memory_space<vmem>>) attributes {dimension_semantics = [], scalar_prefetch = 0 : i64, scratch_operands = 0 : i64, tpu.core_type = #tpu.core_type<tc>} {
    %c0 = arith.constant 0 : index
    %c0_0 = arith.constant 0 : index
    %0 = vector.load %arg0[%c0, %c0_0] : memref<24x8xf32, #tpu.memory_space<vmem>>, vector<24x8xf32>
    %c0_1 = arith.constant 0 : index
    %c0_2 = arith.constant 0 : index
    %1 = vector.load %arg1[%c0_1, %c0_2] : memref<248x32xf32, #tpu.memory_space<vmem>>, vector<24x24xf32>
    %c24 = arith.constant 24 : index
    %c0_3 = arith.constant 0 : index
    %2 = vector.load %arg1[%c24, %c0_3] : memref<248x32xf32, #tpu.memory_space<vmem>>, vector<24x24xf32>
    %c104 = arith.constant 104 : index
    %c0_4 = arith.constant 0 : index
    %3 = vector.load %arg1[%c104, %c0_4] : memref<248x32xf32, #tpu.memory_space<vmem>>, vector<8x16xf32>
    %c112 = arith.constant 112 : index
    %c0_5 = arith.constant 0 : index
    %4 = vector.load %arg1[%c112, %c0_5] : memref<248x32xf32, #tpu.memory_space<vmem>>, vector<8x16xf32>
    %cst = arith.constant dense<0.000000e+00> : vector<24x16xf32>
    %5 = tpu.matmul %0, %3, %cst {dimension_numbers = #tpu.dot_dimension_numbers<[1], [0], [0], [1], [0, 0, 1, 1], [], []>} : vector<24x8xf32>, vector<8x16xf32>, vector<24x16xf32> -> vector<24x16xf32>
    %cst_6 = arith.constant dense<0.000000e+00> : vector<24x16xf32>
    %6 = tpu.matmul %1, %5, %cst_6 {dimension_numbers = #tpu.dot_dimension_numbers<[1], [0], [0], [1], [0, 0, 1, 1], [], []>} : vector<24x24xf32>, vector<24x16xf32>, vector<24x16xf32> -> vector<24x16xf32>
    %cst_7 = arith.constant dense<0.000000e+00> : vector<24x16xf32>
    %7 = tpu.matmul %0, %4, %cst_7 {dimension_numbers = #tpu.dot_dimension_numbers<[1], [0], [0], [1], [0, 0, 1, 1], [], []>} : vector<24x8xf32>, vector<8x16xf32>, vector<24x16xf32> -> vector<24x16xf32>
    %cst_8 = arith.constant dense<0.000000e+00> : vector<24x16xf32>
    %8 = tpu.matmul %2, %7, %cst_8 {dimension_numbers = #tpu.dot_dimension_numbers<[1], [0], [0], [1], [0, 0, 1, 1], [], []>} : vector<24x24xf32>, vector<24x16xf32>, vector<24x16xf32> -> vector<24x16xf32>
    %9 = arith.addf %6, %8 : vector<24x16xf32>
    %c232 = arith.constant 232 : index
    %c0_9 = arith.constant 0 : index
    %10 = vector.load %arg1[%c232, %c0_9] : memref<248x32xf32, #tpu.memory_space<vmem>>, vector<1x16xf32>
    %11 = vector.broadcast %10 : vector<1x16xf32> to vector<24x16xf32>
    %12 = arith.addf %9, %11 : vector<24x16xf32>
    %cst_10 = arith.constant 0.000000e+00 : f32
    %13 = vector.broadcast %cst_10 : f32 to vector<24x16xf32>
    %14 = arith.maximumf %12, %13 : vector<24x16xf32>
    %c120 = arith.constant 120 : index
    %c0_11 = arith.constant 0 : index
    %15 = vector.load %arg1[%c120, %c0_11] : memref<248x32xf32, #tpu.memory_space<vmem>>, vector<16x16xf32>
    %c136 = arith.constant 136 : index
    %c0_12 = arith.constant 0 : index
    %16 = vector.load %arg1[%c136, %c0_12] : memref<248x32xf32, #tpu.memory_space<vmem>>, vector<16x16xf32>
    %cst_13 = arith.constant dense<0.000000e+00> : vector<24x16xf32>
    %17 = tpu.matmul %14, %15, %cst_13 {dimension_numbers = #tpu.dot_dimension_numbers<[1], [0], [0], [1], [0, 0, 1, 1], [], []>} : vector<24x16xf32>, vector<16x16xf32>, vector<24x16xf32> -> vector<24x16xf32>
    %cst_14 = arith.constant dense<0.000000e+00> : vector<24x16xf32>
    %18 = tpu.matmul %1, %17, %cst_14 {dimension_numbers = #tpu.dot_dimension_numbers<[1], [0], [0], [1], [0, 0, 1, 1], [], []>} : vector<24x24xf32>, vector<24x16xf32>, vector<24x16xf32> -> vector<24x16xf32>
    %cst_15 = arith.constant dense<0.000000e+00> : vector<24x16xf32>
    %19 = tpu.matmul %14, %16, %cst_15 {dimension_numbers = #tpu.dot_dimension_numbers<[1], [0], [0], [1], [0, 0, 1, 1], [], []>} : vector<24x16xf32>, vector<16x16xf32>, vector<24x16xf32> -> vector<24x16xf32>
    %cst_16 = arith.constant dense<0.000000e+00> : vector<24x16xf32>
    %20 = tpu.matmul %2, %19, %cst_16 {dimension_numbers = #tpu.dot_dimension_numbers<[1], [0], [0], [1], [0, 0, 1, 1], [], []>} : vector<24x24xf32>, vector<24x16xf32>, vector<24x16xf32> -> vector<24x16xf32>
    %21 = arith.addf %18, %20 : vector<24x16xf32>
    %c233 = arith.constant 233 : index
    %c0_17 = arith.constant 0 : index
    %22 = vector.load %arg1[%c233, %c0_17] : memref<248x32xf32, #tpu.memory_space<vmem>>, vector<1x16xf32>
    %23 = vector.broadcast %22 : vector<1x16xf32> to vector<24x16xf32>
    %24 = arith.addf %21, %23 : vector<24x16xf32>
    %cst_18 = arith.constant 0.000000e+00 : f32
    %25 = vector.broadcast %cst_18 : f32 to vector<24x16xf32>
    %26 = arith.maximumf %24, %25 : vector<24x16xf32>
    %c152 = arith.constant 152 : index
    %c0_19 = arith.constant 0 : index
    %27 = vector.load %arg1[%c152, %c0_19] : memref<248x32xf32, #tpu.memory_space<vmem>>, vector<8x16xf32>
    %c160 = arith.constant 160 : index
    %c0_20 = arith.constant 0 : index
    %28 = vector.load %arg1[%c160, %c0_20] : memref<248x32xf32, #tpu.memory_space<vmem>>, vector<8x16xf32>
    %cst_21 = arith.constant dense<0.000000e+00> : vector<24x16xf32>
    %29 = tpu.matmul %0, %27, %cst_21 {dimension_numbers = #tpu.dot_dimension_numbers<[1], [0], [0], [1], [0, 0, 1, 1], [], []>} : vector<24x8xf32>, vector<8x16xf32>, vector<24x16xf32> -> vector<24x16xf32>
    %c234 = arith.constant 234 : index
    %c0_22 = arith.constant 0 : index
    %30 = vector.load %arg1[%c234, %c0_22] : memref<248x32xf32, #tpu.memory_space<vmem>>, vector<1x16xf32>
    %31 = vector.broadcast %30 : vector<1x16xf32> to vector<24x16xf32>
    %32 = arith.addf %29, %31 : vector<24x16xf32>
    %cst_23 = arith.constant dense<0.000000e+00> : vector<24x16xf32>
    %33 = tpu.matmul %0, %28, %cst_23 {dimension_numbers = #tpu.dot_dimension_numbers<[1], [0], [0], [1], [0, 0, 1, 1], [], []>} : vector<24x8xf32>, vector<8x16xf32>, vector<24x16xf32> -> vector<24x16xf32>
    %c235 = arith.constant 235 : index
    %c0_24 = arith.constant 0 : index
    %34 = vector.load %arg1[%c235, %c0_24] : memref<248x32xf32, #tpu.memory_space<vmem>>, vector<1x16xf32>
    %35 = vector.broadcast %34 : vector<1x16xf32> to vector<24x16xf32>
    %36 = arith.addf %33, %35 : vector<24x16xf32>
    %c236 = arith.constant 236 : index
    %c0_25 = arith.constant 0 : index
    %37 = vector.load %arg1[%c236, %c0_25] : memref<248x32xf32, #tpu.memory_space<vmem>>, vector<1x16xf32>
    %c240 = arith.constant 240 : index
    %c0_26 = arith.constant 0 : index
    %38 = vector.load %arg1[%c240, %c0_26] : memref<248x32xf32, #tpu.memory_space<vmem>>, vector<1x16xf32>
    %c241 = arith.constant 241 : index
    %c0_27 = arith.constant 0 : index
    %39 = vector.load %arg1[%c241, %c0_27] : memref<248x32xf32, #tpu.memory_space<vmem>>, vector<1x16xf32>
    %c242 = arith.constant 242 : index
    %c0_28 = arith.constant 0 : index
    %40 = vector.load %arg1[%c242, %c0_28] : memref<248x32xf32, #tpu.memory_space<vmem>>, vector<1x16xf32>
    %41 = vector.broadcast %40 : vector<1x16xf32> to vector<24x16xf32>
    %42 = arith.mulf %32, %41 : vector<24x16xf32>
    %c243 = arith.constant 243 : index
    %c0_29 = arith.constant 0 : index
    %43 = vector.load %arg1[%c243, %c0_29] : memref<248x32xf32, #tpu.memory_space<vmem>>, vector<1x16xf32>
    %44 = vector.broadcast %43 : vector<1x16xf32> to vector<24x16xf32>
    %45 = arith.mulf %32, %44 : vector<24x16xf32>
    %46 = vector.extract_strided_slice %36 {offsets = [0, 0], sizes = [8, 16], strides = [1, 1]} : vector<24x16xf32> to vector<8x16xf32>
    %c72 = arith.constant 72 : index
    %c0_30 = arith.constant 0 : index
    %47 = vector.load %arg1[%c72, %c0_30] : memref<248x32xf32, #tpu.memory_space<vmem>>, vector<8x24xf32>
    %c48 = arith.constant 48 : index
    %c0_31 = arith.constant 0 : index
    %48 = vector.load %arg1[%c48, %c0_31] : memref<248x32xf32, #tpu.memory_space<vmem>>, vector<8x24xf32>
    %49 = vector.shape_cast %32 : vector<24x16xf32> to vector<1x24x16xf32>
    %50 = vector.shape_cast %46 : vector<8x16xf32> to vector<8x1x16xf32>
    %51 = vector.broadcast %49 : vector<1x24x16xf32> to vector<8x24x16xf32>
    %52 = vector.broadcast %50 : vector<8x1x16xf32> to vector<8x24x16xf32>
    %53 = arith.addf %51, %52 : vector<8x24x16xf32>
    %54 = vector.shape_cast %47 : vector<8x24xf32> to vector<8x24x1xf32>
    %55 = vector.shape_cast %37 : vector<1x16xf32> to vector<1x1x16xf32>
    %56 = vector.broadcast %54 : vector<8x24x1xf32> to vector<8x24x16xf32>
    %57 = vector.broadcast %55 : vector<1x1x16xf32> to vector<8x24x16xf32>
    %58 = arith.mulf %56, %57 : vector<8x24x16xf32>
    %59 = arith.addf %53, %58 : vector<8x24x16xf32>
    %cst_32 = arith.constant 0.000000e+00 : f32
    %60 = vector.broadcast %cst_32 : f32 to vector<8x24x16xf32>
    %61 = arith.cmpf ogt, %59, %60 : vector<8x24x16xf32>
    %cst_33 = arith.constant 2.000000e-01 : f32
    %62 = vector.broadcast %cst_33 : f32 to vector<8x24x16xf32>
    %63 = arith.mulf %62, %59 : vector<8x24x16xf32>
    %64 = arith.select %61, %59, %63 : vector<8x24x16xi1>, vector<8x24x16xf32>
    %cst_34 = arith.constant 0.000000e+00 : f32
    %65 = vector.broadcast %cst_34 : f32 to vector<8x16xf32>
    %66 = vector.shape_cast %38 : vector<1x16xf32> to vector<1x1x16xf32>
    %67 = vector.broadcast %66 : vector<1x1x16xf32> to vector<8x24x16xf32>
    %68 = arith.mulf %64, %67 : vector<8x24x16xf32>
    %cst_35 = arith.constant dense<0.000000e+00> : vector<8x24xf32>
    %69 = vector.multi_reduction <add>, %68, %cst_35 [2] : vector<8x24x16xf32> to vector<8x24xf32>
    %cst_36 = arith.constant 0.000000e+00 : f32
    %70 = vector.broadcast %cst_36 : f32 to vector<8x24xf32>
    %71 = arith.cmpf ogt, %48, %70 : vector<8x24xf32>
    %cst_37 = arith.constant -1.000000e+30 : f32
    %72 = vector.broadcast %cst_37 : f32 to vector<8x24xf32>
    %73 = arith.select %71, %69, %72 : vector<8x24xi1>, vector<8x24xf32>
    %cst_38 = arith.constant dense<0xFF800000> : vector<8xf32>
    %74 = vector.multi_reduction <maximumf>, %73, %cst_38 [1] : vector<8x24xf32> to vector<8xf32>
    %75 = vector.shape_cast %74 : vector<8xf32> to vector<8x1xf32>
    %76 = vector.broadcast %75 : vector<8x1xf32> to vector<8x24xf32>
    %77 = arith.subf %73, %76 : vector<8x24xf32>
    %cst_39 = arith.constant 0.000000e+00 : f32
    %78 = vector.broadcast %cst_39 : f32 to vector<8x24xf32>
    %79 = arith.cmpf ogt, %48, %78 : vector<8x24xf32>
    %80 = math.exp %77 : vector<8x24xf32>
    %cst_40 = arith.constant 0.000000e+00 : f32
    %81 = vector.broadcast %cst_40 : f32 to vector<8x24xf32>
    %82 = arith.select %79, %80, %81 : vector<8x24xi1>, vector<8x24xf32>
    %cst_41 = arith.constant dense<0.000000e+00> : vector<8xf32>
    %83 = vector.multi_reduction <add>, %82, %cst_41 [1] : vector<8x24xf32> to vector<8xf32>
    %84 = vector.shape_cast %83 : vector<8xf32> to vector<8x1xf32>
    %85 = tpu.reciprocal %84 : vector<8x1xf32> -> vector<8x1xf32>
    %86 = vector.broadcast %85 : vector<8x1xf32> to vector<8x24xf32>
    %87 = arith.mulf %82, %86 : vector<8x24xf32>
    %cst_42 = arith.constant dense<0.000000e+00> : vector<8x16xf32>
    %88 = tpu.matmul %87, %42, %cst_42 {dimension_numbers = #tpu.dot_dimension_numbers<[1], [0], [0], [1], [0, 0, 1, 1], [], []>} : vector<8x24xf32>, vector<24x16xf32>, vector<8x16xf32> -> vector<8x16xf32>
    %89 = arith.addf %65, %88 : vector<8x16xf32>
    %90 = vector.shape_cast %39 : vector<1x16xf32> to vector<1x1x16xf32>
    %91 = vector.broadcast %90 : vector<1x1x16xf32> to vector<8x24x16xf32>
    %92 = arith.mulf %64, %91 : vector<8x24x16xf32>
    %cst_43 = arith.constant dense<0.000000e+00> : vector<8x24xf32>
    %93 = vector.multi_reduction <add>, %92, %cst_43 [2] : vector<8x24x16xf32> to vector<8x24xf32>
    %cst_44 = arith.constant 0.000000e+00 : f32
    %94 = vector.broadcast %cst_44 : f32 to vector<8x24xf32>
    %95 = arith.cmpf ogt, %48, %94 : vector<8x24xf32>
    %cst_45 = arith.constant -1.000000e+30 : f32
    %96 = vector.broadcast %cst_45 : f32 to vector<8x24xf32>
    %97 = arith.select %95, %93, %96 : vector<8x24xi1>, vector<8x24xf32>
    %cst_46 = arith.constant dense<0xFF800000> : vector<8xf32>
    %98 = vector.multi_reduction <maximumf>, %97, %cst_46 [1] : vector<8x24xf32> to vector<8xf32>
    %99 = vector.shape_cast %98 : vector<8xf32> to vector<8x1xf32>
    %100 = vector.broadcast %99 : vector<8x1xf32> to vector<8x24xf32>
    %101 = arith.subf %97, %100 : vector<8x24xf32>
    %cst_47 = arith.constant 0.000000e+00 : f32
    %102 = vector.broadcast %cst_47 : f32 to vector<8x24xf32>
    %103 = arith.cmpf ogt, %48, %102 : vector<8x24xf32>
    %104 = math.exp %101 : vector<8x24xf32>
    %cst_48 = arith.constant 0.000000e+00 : f32
    %105 = vector.broadcast %cst_48 : f32 to vector<8x24xf32>
    %106 = arith.select %103, %104, %105 : vector<8x24xi1>, vector<8x24xf32>
    %cst_49 = arith.constant dense<0.000000e+00> : vector<8xf32>
    %107 = vector.multi_reduction <add>, %106, %cst_49 [1] : vector<8x24xf32> to vector<8xf32>
    %108 = vector.shape_cast %107 : vector<8xf32> to vector<8x1xf32>
    %109 = tpu.reciprocal %108 : vector<8x1xf32> -> vector<8x1xf32>
    %110 = vector.broadcast %109 : vector<8x1xf32> to vector<8x24xf32>
    %111 = arith.mulf %106, %110 : vector<8x24xf32>
    %cst_50 = arith.constant dense<0.000000e+00> : vector<8x16xf32>
    %112 = tpu.matmul %111, %45, %cst_50 {dimension_numbers = #tpu.dot_dimension_numbers<[1], [0], [0], [1], [0, 0, 1, 1], [], []>} : vector<8x24xf32>, vector<24x16xf32>, vector<8x16xf32> -> vector<8x16xf32>
    %113 = arith.addf %89, %112 : vector<8x16xf32>
    %114 = vector.extract_strided_slice %36 {offsets = [8, 0], sizes = [8, 16], strides = [1, 1]} : vector<24x16xf32> to vector<8x16xf32>
    %c80 = arith.constant 80 : index
    %c0_51 = arith.constant 0 : index
    %115 = vector.load %arg1[%c80, %c0_51] : memref<248x32xf32, #tpu.memory_space<vmem>>, vector<8x24xf32>
    %c56 = arith.constant 56 : index
    %c0_52 = arith.constant 0 : index
    %116 = vector.load %arg1[%c56, %c0_52] : memref<248x32xf32, #tpu.memory_space<vmem>>, vector<8x24xf32>
    %117 = vector.shape_cast %32 : vector<24x16xf32> to vector<1x24x16xf32>
    %118 = vector.shape_cast %114 : vector<8x16xf32> to vector<8x1x16xf32>
    %119 = vector.broadcast %117 : vector<1x24x16xf32> to vector<8x24x16xf32>
    %120 = vector.broadcast %118 : vector<8x1x16xf32> to vector<8x24x16xf32>
    %121 = arith.addf %119, %120 : vector<8x24x16xf32>
    %122 = vector.shape_cast %115 : vector<8x24xf32> to vector<8x24x1xf32>
    %123 = vector.shape_cast %37 : vector<1x16xf32> to vector<1x1x16xf32>
    %124 = vector.broadcast %122 : vector<8x24x1xf32> to vector<8x24x16xf32>
    %125 = vector.broadcast %123 : vector<1x1x16xf32> to vector<8x24x16xf32>
    %126 = arith.mulf %124, %125 : vector<8x24x16xf32>
    %127 = arith.addf %121, %126 : vector<8x24x16xf32>
    %cst_53 = arith.constant 0.000000e+00 : f32
    %128 = vector.broadcast %cst_53 : f32 to vector<8x24x16xf32>
    %129 = arith.cmpf ogt, %127, %128 : vector<8x24x16xf32>
    %cst_54 = arith.constant 2.000000e-01 : f32
    %130 = vector.broadcast %cst_54 : f32 to vector<8x24x16xf32>
    %131 = arith.mulf %130, %127 : vector<8x24x16xf32>
    %132 = arith.select %129, %127, %131 : vector<8x24x16xi1>, vector<8x24x16xf32>
    %cst_55 = arith.constant 0.000000e+00 : f32
    %133 = vector.broadcast %cst_55 : f32 to vector<8x16xf32>
    %134 = vector.shape_cast %38 : vector<1x16xf32> to vector<1x1x16xf32>
    %135 = vector.broadcast %134 : vector<1x1x16xf32> to vector<8x24x16xf32>
    %136 = arith.mulf %132, %135 : vector<8x24x16xf32>
    %cst_56 = arith.constant dense<0.000000e+00> : vector<8x24xf32>
    %137 = vector.multi_reduction <add>, %136, %cst_56 [2] : vector<8x24x16xf32> to vector<8x24xf32>
    %cst_57 = arith.constant 0.000000e+00 : f32
    %138 = vector.broadcast %cst_57 : f32 to vector<8x24xf32>
    %139 = arith.cmpf ogt, %116, %138 : vector<8x24xf32>
    %cst_58 = arith.constant -1.000000e+30 : f32
    %140 = vector.broadcast %cst_58 : f32 to vector<8x24xf32>
    %141 = arith.select %139, %137, %140 : vector<8x24xi1>, vector<8x24xf32>
    %cst_59 = arith.constant dense<0xFF800000> : vector<8xf32>
    %142 = vector.multi_reduction <maximumf>, %141, %cst_59 [1] : vector<8x24xf32> to vector<8xf32>
    %143 = vector.shape_cast %142 : vector<8xf32> to vector<8x1xf32>
    %144 = vector.broadcast %143 : vector<8x1xf32> to vector<8x24xf32>
    %145 = arith.subf %141, %144 : vector<8x24xf32>
    %cst_60 = arith.constant 0.000000e+00 : f32
    %146 = vector.broadcast %cst_60 : f32 to vector<8x24xf32>
    %147 = arith.cmpf ogt, %116, %146 : vector<8x24xf32>
    %148 = math.exp %145 : vector<8x24xf32>
    %cst_61 = arith.constant 0.000000e+00 : f32
    %149 = vector.broadcast %cst_61 : f32 to vector<8x24xf32>
    %150 = arith.select %147, %148, %149 : vector<8x24xi1>, vector<8x24xf32>
    %cst_62 = arith.constant dense<0.000000e+00> : vector<8xf32>
    %151 = vector.multi_reduction <add>, %150, %cst_62 [1] : vector<8x24xf32> to vector<8xf32>
    %152 = vector.shape_cast %151 : vector<8xf32> to vector<8x1xf32>
    %153 = tpu.reciprocal %152 : vector<8x1xf32> -> vector<8x1xf32>
    %154 = vector.broadcast %153 : vector<8x1xf32> to vector<8x24xf32>
    %155 = arith.mulf %150, %154 : vector<8x24xf32>
    %cst_63 = arith.constant dense<0.000000e+00> : vector<8x16xf32>
    %156 = tpu.matmul %155, %42, %cst_63 {dimension_numbers = #tpu.dot_dimension_numbers<[1], [0], [0], [1], [0, 0, 1, 1], [], []>} : vector<8x24xf32>, vector<24x16xf32>, vector<8x16xf32> -> vector<8x16xf32>
    %157 = arith.addf %133, %156 : vector<8x16xf32>
    %158 = vector.shape_cast %39 : vector<1x16xf32> to vector<1x1x16xf32>
    %159 = vector.broadcast %158 : vector<1x1x16xf32> to vector<8x24x16xf32>
    %160 = arith.mulf %132, %159 : vector<8x24x16xf32>
    %cst_64 = arith.constant dense<0.000000e+00> : vector<8x24xf32>
    %161 = vector.multi_reduction <add>, %160, %cst_64 [2] : vector<8x24x16xf32> to vector<8x24xf32>
    %cst_65 = arith.constant 0.000000e+00 : f32
    %162 = vector.broadcast %cst_65 : f32 to vector<8x24xf32>
    %163 = arith.cmpf ogt, %116, %162 : vector<8x24xf32>
    %cst_66 = arith.constant -1.000000e+30 : f32
    %164 = vector.broadcast %cst_66 : f32 to vector<8x24xf32>
    %165 = arith.select %163, %161, %164 : vector<8x24xi1>, vector<8x24xf32>
    %cst_67 = arith.constant dense<0xFF800000> : vector<8xf32>
    %166 = vector.multi_reduction <maximumf>, %165, %cst_67 [1] : vector<8x24xf32> to vector<8xf32>
    %167 = vector.shape_cast %166 : vector<8xf32> to vector<8x1xf32>
    %168 = vector.broadcast %167 : vector<8x1xf32> to vector<8x24xf32>
    %169 = arith.subf %165, %168 : vector<8x24xf32>
    %cst_68 = arith.constant 0.000000e+00 : f32
    %170 = vector.broadcast %cst_68 : f32 to vector<8x24xf32>
    %171 = arith.cmpf ogt, %116, %170 : vector<8x24xf32>
    %172 = math.exp %169 : vector<8x24xf32>
    %cst_69 = arith.constant 0.000000e+00 : f32
    %173 = vector.broadcast %cst_69 : f32 to vector<8x24xf32>
    %174 = arith.select %171, %172, %173 : vector<8x24xi1>, vector<8x24xf32>
    %cst_70 = arith.constant dense<0.000000e+00> : vector<8xf32>
    %175 = vector.multi_reduction <add>, %174, %cst_70 [1] : vector<8x24xf32> to vector<8xf32>
    %176 = vector.shape_cast %175 : vector<8xf32> to vector<8x1xf32>
    %177 = tpu.reciprocal %176 : vector<8x1xf32> -> vector<8x1xf32>
    %178 = vector.broadcast %177 : vector<8x1xf32> to vector<8x24xf32>
    %179 = arith.mulf %174, %178 : vector<8x24xf32>
    %cst_71 = arith.constant dense<0.000000e+00> : vector<8x16xf32>
    %180 = tpu.matmul %179, %45, %cst_71 {dimension_numbers = #tpu.dot_dimension_numbers<[1], [0], [0], [1], [0, 0, 1, 1], [], []>} : vector<8x24xf32>, vector<24x16xf32>, vector<8x16xf32> -> vector<8x16xf32>
    %181 = arith.addf %157, %180 : vector<8x16xf32>
    %182 = vector.extract_strided_slice %36 {offsets = [16, 0], sizes = [8, 16], strides = [1, 1]} : vector<24x16xf32> to vector<8x16xf32>
    %c88 = arith.constant 88 : index
    %c0_72 = arith.constant 0 : index
    %183 = vector.load %arg1[%c88, %c0_72] : memref<248x32xf32, #tpu.memory_space<vmem>>, vector<8x24xf32>
    %c64 = arith.constant 64 : index
    %c0_73 = arith.constant 0 : index
    %184 = vector.load %arg1[%c64, %c0_73] : memref<248x32xf32, #tpu.memory_space<vmem>>, vector<8x24xf32>
    %185 = vector.shape_cast %32 : vector<24x16xf32> to vector<1x24x16xf32>
    %186 = vector.shape_cast %182 : vector<8x16xf32> to vector<8x1x16xf32>
    %187 = vector.broadcast %185 : vector<1x24x16xf32> to vector<8x24x16xf32>
    %188 = vector.broadcast %186 : vector<8x1x16xf32> to vector<8x24x16xf32>
    %189 = arith.addf %187, %188 : vector<8x24x16xf32>
    %190 = vector.shape_cast %183 : vector<8x24xf32> to vector<8x24x1xf32>
    %191 = vector.shape_cast %37 : vector<1x16xf32> to vector<1x1x16xf32>
    %192 = vector.broadcast %190 : vector<8x24x1xf32> to vector<8x24x16xf32>
    %193 = vector.broadcast %191 : vector<1x1x16xf32> to vector<8x24x16xf32>
    %194 = arith.mulf %192, %193 : vector<8x24x16xf32>
    %195 = arith.addf %189, %194 : vector<8x24x16xf32>
    %cst_74 = arith.constant 0.000000e+00 : f32
    %196 = vector.broadcast %cst_74 : f32 to vector<8x24x16xf32>
    %197 = arith.cmpf ogt, %195, %196 : vector<8x24x16xf32>
    %cst_75 = arith.constant 2.000000e-01 : f32
    %198 = vector.broadcast %cst_75 : f32 to vector<8x24x16xf32>
    %199 = arith.mulf %198, %195 : vector<8x24x16xf32>
    %200 = arith.select %197, %195, %199 : vector<8x24x16xi1>, vector<8x24x16xf32>
    %cst_76 = arith.constant 0.000000e+00 : f32
    %201 = vector.broadcast %cst_76 : f32 to vector<8x16xf32>
    %202 = vector.shape_cast %38 : vector<1x16xf32> to vector<1x1x16xf32>
    %203 = vector.broadcast %202 : vector<1x1x16xf32> to vector<8x24x16xf32>
    %204 = arith.mulf %200, %203 : vector<8x24x16xf32>
    %cst_77 = arith.constant dense<0.000000e+00> : vector<8x24xf32>
    %205 = vector.multi_reduction <add>, %204, %cst_77 [2] : vector<8x24x16xf32> to vector<8x24xf32>
    %cst_78 = arith.constant 0.000000e+00 : f32
    %206 = vector.broadcast %cst_78 : f32 to vector<8x24xf32>
    %207 = arith.cmpf ogt, %184, %206 : vector<8x24xf32>
    %cst_79 = arith.constant -1.000000e+30 : f32
    %208 = vector.broadcast %cst_79 : f32 to vector<8x24xf32>
    %209 = arith.select %207, %205, %208 : vector<8x24xi1>, vector<8x24xf32>
    %cst_80 = arith.constant dense<0xFF800000> : vector<8xf32>
    %210 = vector.multi_reduction <maximumf>, %209, %cst_80 [1] : vector<8x24xf32> to vector<8xf32>
    %211 = vector.shape_cast %210 : vector<8xf32> to vector<8x1xf32>
    %212 = vector.broadcast %211 : vector<8x1xf32> to vector<8x24xf32>
    %213 = arith.subf %209, %212 : vector<8x24xf32>
    %cst_81 = arith.constant 0.000000e+00 : f32
    %214 = vector.broadcast %cst_81 : f32 to vector<8x24xf32>
    %215 = arith.cmpf ogt, %184, %214 : vector<8x24xf32>
    %216 = math.exp %213 : vector<8x24xf32>
    %cst_82 = arith.constant 0.000000e+00 : f32
    %217 = vector.broadcast %cst_82 : f32 to vector<8x24xf32>
    %218 = arith.select %215, %216, %217 : vector<8x24xi1>, vector<8x24xf32>
    %cst_83 = arith.constant dense<0.000000e+00> : vector<8xf32>
    %219 = vector.multi_reduction <add>, %218, %cst_83 [1] : vector<8x24xf32> to vector<8xf32>
    %220 = vector.shape_cast %219 : vector<8xf32> to vector<8x1xf32>
    %221 = tpu.reciprocal %220 : vector<8x1xf32> -> vector<8x1xf32>
    %222 = vector.broadcast %221 : vector<8x1xf32> to vector<8x24xf32>
    %223 = arith.mulf %218, %222 : vector<8x24xf32>
    %cst_84 = arith.constant dense<0.000000e+00> : vector<8x16xf32>
    %224 = tpu.matmul %223, %42, %cst_84 {dimension_numbers = #tpu.dot_dimension_numbers<[1], [0], [0], [1], [0, 0, 1, 1], [], []>} : vector<8x24xf32>, vector<24x16xf32>, vector<8x16xf32> -> vector<8x16xf32>
    %225 = arith.addf %201, %224 : vector<8x16xf32>
    %226 = vector.shape_cast %39 : vector<1x16xf32> to vector<1x1x16xf32>
    %227 = vector.broadcast %226 : vector<1x1x16xf32> to vector<8x24x16xf32>
    %228 = arith.mulf %200, %227 : vector<8x24x16xf32>
    %cst_85 = arith.constant dense<0.000000e+00> : vector<8x24xf32>
    %229 = vector.multi_reduction <add>, %228, %cst_85 [2] : vector<8x24x16xf32> to vector<8x24xf32>
    %cst_86 = arith.constant 0.000000e+00 : f32
    %230 = vector.broadcast %cst_86 : f32 to vector<8x24xf32>
    %231 = arith.cmpf ogt, %184, %230 : vector<8x24xf32>
    %cst_87 = arith.constant -1.000000e+30 : f32
    %232 = vector.broadcast %cst_87 : f32 to vector<8x24xf32>
    %233 = arith.select %231, %229, %232 : vector<8x24xi1>, vector<8x24xf32>
    %cst_88 = arith.constant dense<0xFF800000> : vector<8xf32>
    %234 = vector.multi_reduction <maximumf>, %233, %cst_88 [1] : vector<8x24xf32> to vector<8xf32>
    %235 = vector.shape_cast %234 : vector<8xf32> to vector<8x1xf32>
    %236 = vector.broadcast %235 : vector<8x1xf32> to vector<8x24xf32>
    %237 = arith.subf %233, %236 : vector<8x24xf32>
    %cst_89 = arith.constant 0.000000e+00 : f32
    %238 = vector.broadcast %cst_89 : f32 to vector<8x24xf32>
    %239 = arith.cmpf ogt, %184, %238 : vector<8x24xf32>
    %240 = math.exp %237 : vector<8x24xf32>
    %cst_90 = arith.constant 0.000000e+00 : f32
    %241 = vector.broadcast %cst_90 : f32 to vector<8x24xf32>
    %242 = arith.select %239, %240, %241 : vector<8x24xi1>, vector<8x24xf32>
    %cst_91 = arith.constant dense<0.000000e+00> : vector<8xf32>
    %243 = vector.multi_reduction <add>, %242, %cst_91 [1] : vector<8x24xf32> to vector<8xf32>
    %244 = vector.shape_cast %243 : vector<8xf32> to vector<8x1xf32>
    %245 = tpu.reciprocal %244 : vector<8x1xf32> -> vector<8x1xf32>
    %246 = vector.broadcast %245 : vector<8x1xf32> to vector<8x24xf32>
    %247 = arith.mulf %242, %246 : vector<8x24xf32>
    %cst_92 = arith.constant dense<0.000000e+00> : vector<8x16xf32>
    %248 = tpu.matmul %247, %45, %cst_92 {dimension_numbers = #tpu.dot_dimension_numbers<[1], [0], [0], [1], [0, 0, 1, 1], [], []>} : vector<8x24xf32>, vector<24x16xf32>, vector<8x16xf32> -> vector<8x16xf32>
    %249 = arith.addf %225, %248 : vector<8x16xf32>
    %250 = tpu.concatenate %113, %181, %249 in 0 : vector<8x16xf32>, vector<8x16xf32>, vector<8x16xf32> -> vector<24x16xf32>
    %c237 = arith.constant 237 : index
    %c0_93 = arith.constant 0 : index
    %251 = vector.load %arg1[%c237, %c0_93] : memref<248x32xf32, #tpu.memory_space<vmem>>, vector<1x16xf32>
    %252 = vector.broadcast %251 : vector<1x16xf32> to vector<24x16xf32>
    %253 = arith.addf %250, %252 : vector<24x16xf32>
    %c96 = arith.constant 96 : index
    %c0_94 = arith.constant 0 : index
    %254 = vector.load %arg1[%c96, %c0_94] : memref<248x32xf32, #tpu.memory_space<vmem>>, vector<2x24xf32>
    %cst_95 = arith.constant dense<0.000000e+00> : vector<2x16xf32>
    %255 = tpu.matmul %254, %26, %cst_95 {dimension_numbers = #tpu.dot_dimension_numbers<[1], [0], [0], [1], [0, 0, 1, 1], [], []>} : vector<2x24xf32>, vector<24x16xf32>, vector<2x16xf32> -> vector<2x16xf32>
    %cst_96 = arith.constant dense<0.000000e+00> : vector<2x16xf32>
    %256 = tpu.matmul %254, %253, %cst_96 {dimension_numbers = #tpu.dot_dimension_numbers<[1], [0], [0], [1], [0, 0, 1, 1], [], []>} : vector<2x24xf32>, vector<24x16xf32>, vector<2x16xf32> -> vector<2x16xf32>
    %c168 = arith.constant 168 : index
    %c0_97 = arith.constant 0 : index
    %257 = vector.load %arg1[%c168, %c0_97] : memref<248x32xf32, #tpu.memory_space<vmem>>, vector<16x32xf32>
    %cst_98 = arith.constant dense<0.000000e+00> : vector<2x32xf32>
    %258 = tpu.matmul %255, %257, %cst_98 {dimension_numbers = #tpu.dot_dimension_numbers<[1], [0], [0], [1], [0, 0, 1, 1], [], []>} : vector<2x16xf32>, vector<16x32xf32>, vector<2x32xf32> -> vector<2x32xf32>
    %c184 = arith.constant 184 : index
    %c0_99 = arith.constant 0 : index
    %259 = vector.load %arg1[%c184, %c0_99] : memref<248x32xf32, #tpu.memory_space<vmem>>, vector<16x32xf32>
    %cst_100 = arith.constant dense<0.000000e+00> : vector<2x32xf32>
    %260 = tpu.matmul %256, %259, %cst_100 {dimension_numbers = #tpu.dot_dimension_numbers<[1], [0], [0], [1], [0, 0, 1, 1], [], []>} : vector<2x16xf32>, vector<16x32xf32>, vector<2x32xf32> -> vector<2x32xf32>
    %261 = arith.addf %258, %260 : vector<2x32xf32>
    %c238 = arith.constant 238 : index
    %c0_101 = arith.constant 0 : index
    %262 = vector.load %arg1[%c238, %c0_101] : memref<248x32xf32, #tpu.memory_space<vmem>>, vector<1x32xf32>
    %263 = vector.broadcast %262 : vector<1x32xf32> to vector<2x32xf32>
    %264 = arith.addf %261, %263 : vector<2x32xf32>
    %cst_102 = arith.constant 0.000000e+00 : f32
    %265 = vector.broadcast %cst_102 : f32 to vector<2x32xf32>
    %266 = arith.maximumf %264, %265 : vector<2x32xf32>
    %c200 = arith.constant 200 : index
    %c0_103 = arith.constant 0 : index
    %267 = vector.load %arg1[%c200, %c0_103] : memref<248x32xf32, #tpu.memory_space<vmem>>, vector<32x3xf32>
    %cst_104 = arith.constant dense<0.000000e+00> : vector<2x3xf32>
    %268 = tpu.matmul %266, %267, %cst_104 {dimension_numbers = #tpu.dot_dimension_numbers<[1], [0], [0], [1], [0, 0, 1, 1], [], []>} : vector<2x32xf32>, vector<32x3xf32>, vector<2x3xf32> -> vector<2x3xf32>
    %c239 = arith.constant 239 : index
    %c0_105 = arith.constant 0 : index
    %269 = vector.load %arg1[%c239, %c0_105] : memref<248x32xf32, #tpu.memory_space<vmem>>, vector<1x3xf32>
    %270 = vector.broadcast %269 : vector<1x3xf32> to vector<2x3xf32>
    %271 = arith.addf %268, %270 : vector<2x3xf32>
    %c0_106 = arith.constant 0 : index
    %c0_107 = arith.constant 0 : index
    %272 = vector.load %arg2[%c0_106, %c0_107] : memref<2x3xf32, #tpu.memory_space<vmem>>, vector<2x3xf32>
    tpu.vector_store %arg2[%c0_106, %c0_107], %271 {strides = array<i32>} : memref<2x3xf32, #tpu.memory_space<vmem>>, vector<2x3xf32>,
    return
  }
}

</mosaic_0001>

<llo_original>
// kernel: fused_forward.1
$region0: #{fused_forward.1}
  #allocation0 [shape = 'u32[]', space=smem, size = 0x4, offset = 0x4, fixed_abs, tag = 'smem constant byte address 0x4 - core index']
  #allocation1 [shape = 'u32[72,128]{1,0:T(1,128)}', space=vmem, size = 0x9000, scoped, tag = 'internal scratch']
  %s0 = inlined_call_operand.vmem [shape: f32[24,8], index: 0, kind: input, shape index: {}]
  %s1 = inlined_call_operand.vmem [shape: f32[248,32], index: 1, kind: input, shape index: {}]
  %s2 = inlined_call_operand.hbm [shape: f32[2,3], index: 2, kind: output, shape index: {}]
  %s3 = sld [smem:[#allocation0]]
  $region18: #{fused_forward.1} parent=0
    _
  %s5 = ssub.s32 1, %s3
  %s6 = scalar_select 0, %s5, %s3
  $region1: #{fused_forward.1} parent=0
    #allocation2 [shape = 'u8[1024]{0}', space=vmem, size = 0x400, scoped, tag = 'output window, operand 0, single buffered']
    #allocation3 [shape = 's32[1]{0}', space=sflag, size = 0x4, scoped, tag = 'scoped memory for fused_forward.1']
    %7 = vsyncpa [#allocation3], 0
    // Predicated region
    $region2: #{fused_forward.1} parent=1 // pred_check
      _
    $region3: #{fused_forward.1} parent=1 // pred_check_branch
      %9 = sbr.rel (0) target = $region5
    $region4: #{fused_forward.1} parent=1 // pred_region
      _
    $region5: #{fused_forward.1} parent=1 // pred_fallthru
      _
    // Predicated region
    $region6: #{fused_forward.1} parent=1 // pred_check
      _
    $region7: #{fused_forward.1} parent=1 // pred_check_branch
      %11 = sbr.rel (0) target = $region9
    $region8: #{fused_forward.1} parent=1 // pred_region
      _
    $region9: #{fused_forward.1} parent=1 // pred_fallthru
      _
    %v12 = vld [vmem:[%s0] sm:$0xff]
    %v13 = vld [vmem:[%s0 + $0x8] sm:$0xff]
    %v14 = vld [vmem:[%s0 + $0x10] sm:$0xff]
    %v15 = vld [vmem:[%s1] sm:$0xff]
    %v16 = vld [vmem:[%s1 + $0x8] sm:$0xff]
    %v17 = vld [vmem:[%s1 + $0x10] sm:$0xff]
    %v18 = vld [vmem:[%s1 + $0x18] sm:$0xff]
    %v19 = vld [vmem:[%s1 + $0x20] sm:$0xff]
    %v20 = vld [vmem:[%s1 + $0x28] sm:$0xff]
    %v21 = vld [vmem:[%s1 + $0x68] sm:$0xff]
    %v22 = vld [vmem:[%s1 + $0x70] sm:$0xff]
    %vm23 = vcmask 64512
    %v25 = vsel %vm23, %v12, 0
    %v28 = vsel %vm23, %v13, 0
    %v31 = vsel %vm23, %v14, 0
    %33 = vmatpush.msra.mxu0 0.0
    %34 = vmatpush.msra.mxu0 0.0
    %35 = vmatpush.msra.mxu0 0.0
    %36 = vmatpush.msra.mxu0 0.0
    %37 = vmatpush.msra.mxu0 0.0
    %38 = vmatpush.msra.mxu0 0.0
    %39 = vmatpush.msra.mxu0 0.0
    %40 = vmatpush.msra.mxu0 0.0
    %41 = vmatpush.msra.mxu0 0.0
    %42 = vmatpush.msra.mxu0 0.0
    %43 = vmatpush.msra.mxu0 0.0
    %44 = vmatpush.msra.mxu0 0.0
    %45 = vmatpush.msra.mxu0 0.0
    %46 = vmatpush.msra.mxu0 0.0
    %47 = vmatpush.msra.mxu0 0.0
    %48 = vmatpush.msra.mxu0 %v21
    %49 = vmatmul.f32.gmra.mxu0 %v25
    %v50 = vpop.f32.mrf.mxu0
    %v51 = vadd.f32 0.0, %v50
    %52 = vmatmul.f32.gmra.mxu0 %v28
    %v53 = vpop.f32.mrf.mxu0
    %v54 = vadd.f32 0.0, %v53
    %55 = vmatmul.f32.gmra.mxu0 %v31
    %v56 = vpop.f32.mrf.mxu0
    %v57 = vadd.f32 0.0, %v56
    %58 = vdwg.mxu0
    %59 = vmatpush.msra.mxu0 0.0
    %60 = vmatpush.msra.mxu0 0.0
    %61 = vmatpush.msra.mxu0 0.0
    %62 = vmatpush.msra.mxu0 0.0
    %63 = vmatpush.msra.mxu0 0.0
    %64 = vmatpush.msra.mxu0 0.0
    %65 = vmatpush.msra.mxu0 0.0
    %66 = vmatpush.msra.mxu0 0.0
    %67 = vmatpush.msra.mxu0 0.0
    %68 = vmatpush.msra.mxu0 0.0
    %69 = vmatpush.msra.mxu0 0.0
    %70 = vmatpush.msra.mxu0 0.0
    %71 = vmatpush.msra.mxu0 0.0
    %72 = vmatpush.msra.mxu0 0.0
    %73 = vmatpush.msra.mxu0 0.0
    %74 = vmatpush.msra.mxu0 %v22
    %75 = vmatmul.f32.gmra.mxu0 %v25
    %v76 = vpop.f32.mrf.mxu0
    %v77 = vadd.f32 0.0, %v76
    %78 = vmatmul.f32.gmra.mxu0 %v28
    %v79 = vpop.f32.mrf.mxu0
    %v80 = vadd.f32 0.0, %v79
    %81 = vmatmul.f32.gmra.mxu0 %v31
    %v82 = vpop.f32.mrf.mxu0
    %v83 = vadd.f32 0.0, %v82
    %84 = vdwg.mxu0
    %vm85 = vcmask 195584
    %v87 = vsel %vm85, %v18, 0
    %v90 = vsel %vm85, %v19, 0
    %v93 = vsel %vm85, %v20, 0
    %95 = vmatpush.msra.mxu0 0.0
    %96 = vmatpush.msra.mxu0 0.0
    %97 = vmatpush.msra.mxu0 0.0
    %98 = vmatpush.msra.mxu0 0.0
    %99 = vmatpush.msra.mxu0 0.0
    %100 = vmatpush.msra.mxu0 0.0
    %101 = vmatpush.msra.mxu0 0.0
    %102 = vmatpush.msra.mxu0 0.0
    %103 = vmatpush.msra.mxu0 0.0
    %104 = vmatpush.msra.mxu0 0.0
    %105 = vmatpush.msra.mxu0 0.0
    %106 = vmatpush.msra.mxu0 0.0
    %107 = vmatpush.msra.mxu0 0.0
    %108 = vmatpush.msra.mxu0 %v83
    %109 = vmatpush.msra.mxu0 %v80
    %110 = vmatpush.msra.mxu0 %v77
    %111 = vmatmul.f32.gmra.mxu0 %v87
    %v112 = vpop.f32.mrf.mxu0
    %v113 = vadd.f32 0.0, %v112
    %114 = vmatmul.f32.gmra.mxu0 %v90
    %v115 = vpop.f32.mrf.mxu0
    %v116 = vadd.f32 0.0, %v115
    %117 = vmatmul.f32.gmra.mxu0 %v93
    %v118 = vpop.f32.mrf.mxu0
    %v119 = vadd.f32 0.0, %v118
    %120 = vdwg.mxu0
    %v122 = vsel %vm85, %v15, 0
    %v125 = vsel %vm85, %v16, 0
    %v128 = vsel %vm85, %v17, 0
    %130 = vmatpush.msra.mxu0 0.0
    %131 = vmatpush.msra.mxu0 0.0
    %132 = vmatpush.msra.mxu0 0.0
    %133 = vmatpush.msra.mxu0 0.0
    %134 = vmatpush.msra.mxu0 0.0
    %135 = vmatpush.msra.mxu0 0.0
    %136 = vmatpush.msra.mxu0 0.0
    %137 = vmatpush.msra.mxu0 0.0
    %138 = vmatpush.msra.mxu0 0.0
    %139 = vmatpush.msra.mxu0 0.0
    %140 = vmatpush.msra.mxu0 0.0
    %141 = vmatpush.msra.mxu0 0.0
    %142 = vmatpush.msra.mxu0 0.0
    %143 = vmatpush.msra.mxu0 %v57
    %144 = vmatpush.msra.mxu0 %v54
    %145 = vmatpush.msra.mxu0 %v51
    %146 = vmatmul.f32.gmra.mxu0 %v122
    %v147 = vpop.f32.mrf.mxu0
    %v148 = vadd.f32 %v113, %v147
    %149 = vmatmul.f32.gmra.mxu0 %v125
    %v150 = vpop.f32.mrf.mxu0
    %v151 = vadd.f32 %v116, %v150
    %152 = vmatmul.f32.gmra.mxu0 %v128
    %v153 = vpop.f32.mrf.mxu0
    %v154 = vadd.f32 %v119, %v153
    %155 = vdwg.mxu0
    %v156 = vld [vmem:[%s1 + $0xe8] sm:$0x1]
    %v157 = vperm.slane %v156, 0
    %v158 = vadd.f32 %v148, %v157
    %v159 = vadd.f32 %v151, %v157
    %v160 = vadd.f32 %v154, %v157
    %v161 = vmax.f32 %v158, 0.0
    %v162 = vmax.f32 %v159, 0.0
    %v163 = vmax.f32 %v160, 0.0
    %v164 = vld [vmem:[%s1 + $0x78] sm:$0xff]
    %v165 = vld [vmem:[%s1 + $0x80] sm:$0xff]
    %v166 = vld [vmem:[%s1 + $0x88] sm:$0xff]
    %v167 = vld [vmem:[%s1 + $0x90] sm:$0xff]
    %vm168 = vcmask 130048
    %v170 = vsel %vm168, %v161, 0
    %v173 = vsel %vm168, %v162, 0
    %v176 = vsel %vm168, %v163, 0
    %178 = vmatpush.msra.mxu0 0.0
    %179 = vmatpush.msra.mxu0 0.0
    %180 = vmatpush.msra.mxu0 0.0
    %181 = vmatpush.msra.mxu0 0.0
    %182 = vmatpush.msra.mxu0 0.0
    %183 = vmatpush.msra.mxu0 0.0
    %184 = vmatpush.msra.mxu0 0.0
    %185 = vmatpush.msra.mxu0 0.0
    %186 = vmatpush.msra.mxu0 0.0
    %187 = vmatpush.msra.mxu0 0.0
    %188 = vmatpush.msra.mxu0 0.0
    %189 = vmatpush.msra.mxu0 0.0
    %190 = vmatpush.msra.mxu0 0.0
    %191 = vmatpush.msra.mxu0 0.0
    %192 = vmatpush.msra.mxu0 %v165
    %193 = vmatpush.msra.mxu0 %v164
    %194 = vmatmul.f32.gmra.mxu0 %v170
    %v195 = vpop.f32.mrf.mxu0
    %v196 = vadd.f32 0.0, %v195
    %197 = vmatmul.f32.gmra.mxu0 %v173
    %v198 = vpop.f32.mrf.mxu0
    %v199 = vadd.f32 0.0, %v198
    %200 = vmatmul.f32.gmra.mxu0 %v176
    %v201 = vpop.f32.mrf.mxu0
    %v202 = vadd.f32 0.0, %v201
    %203 = vdwg.mxu0
    %204 = vmatpush.msra.mxu0 0.0
    %205 = vmatpush.msra.mxu0 0.0
    %206 = vmatpush.msra.mxu0 0.0
    %207 = vmatpush.msra.mxu0 0.0
    %208 = vmatpush.msra.mxu0 0.0
    %209 = vmatpush.msra.mxu0 0.0
    %210 = vmatpush.msra.mxu0 0.0
    %211 = vmatpush.msra.mxu0 0.0
    %212 = vmatpush.msra.mxu0 0.0
    %213 = vmatpush.msra.mxu0 0.0
    %214 = vmatpush.msra.mxu0 0.0
    %215 = vmatpush.msra.mxu0 0.0
    %216 = vmatpush.msra.mxu0 0.0
    %217 = vmatpush.msra.mxu0 0.0
    %218 = vmatpush.msra.mxu0 %v167
    %219 = vmatpush.msra.mxu0 %v166
    %220 = vmatmul.f32.gmra.mxu0 %v170
    %v221 = vpop.f32.mrf.mxu0
    %v222 = vadd.f32 0.0, %v221
    %223 = vmatmul.f32.gmra.mxu0 %v173
    %v224 = vpop.f32.mrf.mxu0
    %v225 = vadd.f32 0.0, %v224
    %226 = vmatmul.f32.gmra.mxu0 %v176
    %v227 = vpop.f32.mrf.mxu0
    %v228 = vadd.f32 0.0, %v227
    %229 = vdwg.mxu0
    %230 = vmatpush.msra.mxu0 0.0
    %231 = vmatpush.msra.mxu0 0.0
    %232 = vmatpush.msra.mxu0 0.0
    %233 = vmatpush.msra.mxu0 0.0
    %234 = vmatpush.msra.mxu0 0.0
    %235 = vmatpush.msra.mxu0 0.0
    %236 = vmatpush.msra.mxu0 0.0
    %237 = vmatpush.msra.mxu0 0.0
    %238 = vmatpush.msra.mxu0 0.0
    %239 = vmatpush.msra.mxu0 0.0
    %240 = vmatpush.msra.mxu0 0.0
    %241 = vmatpush.msra.mxu0 0.0
    %242 = vmatpush.msra.mxu0 0.0
    %243 = vmatpush.msra.mxu0 %v228
    %244 = vmatpush.msra.mxu0 %v225
    %245 = vmatpush.msra.mxu0 %v222
    %246 = vmatmul.f32.gmra.mxu0 %v87
    %v247 = vpop.f32.mrf.mxu0
    %v248 = vadd.f32 0.0, %v247
    %249 = vmatmul.f32.gmra.mxu0 %v90
    %v250 = vpop.f32.mrf.mxu0
    %v251 = vadd.f32 0.0, %v250
    %252 = vmatmul.f32.gmra.mxu0 %v93
    %v253 = vpop.f32.mrf.mxu0
    %v254 = vadd.f32 0.0, %v253
    %255 = vdwg.mxu0
    %256 = vmatpush.msra.mxu0 0.0
    %257 = vmatpush.msra.mxu0 0.0
    %258 = vmatpush.msra.mxu0 0.0
    %259 = vmatpush.msra.mxu0 0.0
    %260 = vmatpush.msra.mxu0 0.0
    %261 = vmatpush.msra.mxu0 0.0
    %262 = vmatpush.msra.mxu0 0.0
    %263 = vmatpush.msra.mxu0 0.0
    %264 = vmatpush.msra.mxu0 0.0
    %265 = vmatpush.msra.mxu0 0.0
    %266 = vmatpush.msra.mxu0 0.0
    %267 = vmatpush.msra.mxu0 0.0
    %268 = vmatpush.msra.mxu0 0.0
    %269 = vmatpush.msra.mxu0 %v202
    %270 = vmatpush.msra.mxu0 %v199
    %271 = vmatpush.msra.mxu0 %v196
    %272 = vmatmul.f32.gmra.mxu0 %v122
    %v273 = vpop.f32.mrf.mxu0
    %v274 = vadd.f32 %v248, %v273
    %275 = vmatmul.f32.gmra.mxu0 %v125
    %v276 = vpop.f32.mrf.mxu0
    %v277 = vadd.f32 %v251, %v276
    %278 = vmatmul.f32.gmra.mxu0 %v128
    %v279 = vpop.f32.mrf.mxu0
    %v280 = vadd.f32 %v254, %v279
    %281 = vdwg.mxu0
    %v282 = vld [vmem:[%s1 + $0xe9] sm:$0x1]
    %v283 = vperm.slane %v282, 0
    %v284 = vadd.f32 %v274, %v283
    %v285 = vadd.f32 %v277, %v283
    %v286 = vadd.f32 %v280, %v283
    %v287 = vmax.f32 %v284, 0.0
    %v288 = vmax.f32 %v285, 0.0
    %v289 = vmax.f32 %v286, 0.0
    %v290 = vld [vmem:[%s1 + $0x98] sm:$0xff]
    %v291 = vld [vmem:[%s1 + $0xa0] sm:$0xff]
    %v292 = vld [vmem:[%s1 + $0xea] sm:$0x1]
    %v293 = vperm.slane %v292, 0
    %294 = vmatpush.msra.mxu0 0.0
    %295 = vmatpush.msra.mxu0 0.0
    %296 = vmatpush.msra.mxu0 0.0
    %297 = vmatpush.msra.mxu0 0.0
    %298 = vmatpush.msra.mxu0 0.0
    %299 = vmatpush.msra.mxu0 0.0
    %300 = vmatpush.msra.mxu0 0.0
    %301 = vmatpush.msra.mxu0 0.0
    %302 = vmatpush.msra.mxu0 0.0
    %303 = vmatpush.msra.mxu0 0.0
    %304 = vmatpush.msra.mxu0 0.0
    %305 = vmatpush.msra.mxu0 0.0
    %306 = vmatpush.msra.mxu0 0.0
    %307 = vmatpush.msra.mxu0 0.0
    %308 = vmatpush.msra.mxu0 0.0
    %309 = vmatpush.msra.mxu0 %v290
    %310 = vmatmul.f32.gmra.mxu0 %v25
    %v311 = vpop.f32.mrf.mxu0
    %v312 = vadd.f32 %v293, %v311
    %313 = vmatmul.f32.gmra.mxu0 %v28
    %v314 = vpop.f32.mrf.mxu0
    %v315 = vadd.f32 %v293, %v314
    %316 = vmatmul.f32.gmra.mxu0 %v31
    %v317 = vpop.f32.mrf.mxu0
    %v318 = vadd.f32 %v293, %v317
    %319 = vdwg.mxu0
    %v320 = vld [vmem:[%s1 + $0xeb] sm:$0x1]
    %v321 = vperm.slane %v320, 0
    %322 = vmatpush.msra.mxu0 0.0
    %323 = vmatpush.msra.mxu0 0.0
    %324 = vmatpush.msra.mxu0 0.0
    %325 = vmatpush.msra.mxu0 0.0
    %326 = vmatpush.msra.mxu0 0.0
    %327 = vmatpush.msra.mxu0 0.0
    %328 = vmatpush.msra.mxu0 0.0
    %329 = vmatpush.msra.mxu0 0.0
    %330 = vmatpush.msra.mxu0 0.0
    %331 = vmatpush.msra.mxu0 0.0
    %332 = vmatpush.msra.mxu0 0.0
    %333 = vmatpush.msra.mxu0 0.0
    %334 = vmatpush.msra.mxu0 0.0
    %335 = vmatpush.msra.mxu0 0.0
    %336 = vmatpush.msra.mxu0 0.0
    %337 = vmatpush.msra.mxu0 %v291
    %338 = vmatmul.f32.gmra.mxu0 %v25
    %v339 = vpop.f32.mrf.mxu0
    %v340 = vadd.f32 %v321, %v339
    %341 = vmatmul.f32.gmra.mxu0 %v28
    %v342 = vpop.f32.mrf.mxu0
    %v343 = vadd.f32 %v321, %v342
    %344 = vmatmul.f32.gmra.mxu0 %v31
    %v345 = vpop.f32.mrf.mxu0
    %v346 = vadd.f32 %v321, %v345
    %347 = vdwg.mxu0
    %v348 = vld [vmem:[%s1 + $0xec] sm:$0x1]
    %v349 = vld [vmem:[%s1 + $0xf0] sm:$0x1]
    %v350 = vld [vmem:[%s1 + $0xf1] sm:$0x1]
    %v351 = vld [vmem:[%s1 + $0xf2] sm:$0x1]
    %v352 = vperm.slane %v351, 0
    %v353 = vmul.f32 %v312, %v352
    %v354 = vmul.f32 %v315, %v352
    %v355 = vmul.f32 %v318, %v352
    %v356 = vld [vmem:[%s1 + $0xf3] sm:$0x1]
    %v357 = vperm.slane %v356, 0
    %v358 = vmul.f32 %v312, %v357
    %v359 = vmul.f32 %v315, %v357
    %v360 = vmul.f32 %v318, %v357
    %v361 = vld [vmem:[%s1 + $0x48] sm:$0xff]
    %v362 = vld [vmem:[%s1 + $0x30] sm:$0xff]
    %v364 = vrot.slane %v340, 1
    %v365 = vrot.slane %v340, 2
    %v366 = vrot.slane %v340, 3
    %v367 = vrot.slane %v340, 4
    %v368 = vrot.slane %v340, 5
    %v369 = vrot.slane %v340, 6
    %v370 = vrot.slane %v340, 7
    %v371 = vperm.slane %v340, 0
    %v372 = vperm.slane %v364, 0
    %v373 = vperm.slane %v365, 0
    %v374 = vperm.slane %v366, 0
    %v375 = vperm.slane %v367, 0
    %v376 = vperm.slane %v368, 0
    %v377 = vperm.slane %v369, 0
    %v378 = vperm.slane %v370, 0
    %v387 = vadd.f32 %v312, %v371
    %v388 = vadd.f32 %v315, %v371
    %v389 = vadd.f32 %v318, %v371
    %v390 = vadd.f32 %v312, %v372
    %v391 = vadd.f32 %v315, %v372
    %v392 = vadd.f32 %v318, %v372
    %v393 = vadd.f32 %v312, %v373
    %v394 = vadd.f32 %v315, %v373
    %v395 = vadd.f32 %v318, %v373
    %v396 = vadd.f32 %v312, %v374
    %v397 = vadd.f32 %v315, %v374
    %v398 = vadd.f32 %v318, %v374
    %v399 = vadd.f32 %v312, %v375
    %v400 = vadd.f32 %v315, %v375
    %v401 = vadd.f32 %v318, %v375
    %v402 = vadd.f32 %v312, %v376
    %v403 = vadd.f32 %v315, %v376
    %v404 = vadd.f32 %v318, %v376
    %v405 = vadd.f32 %v312, %v377
    %v406 = vadd.f32 %v315, %v377
    %v407 = vadd.f32 %v318, %v377
    %v408 = vadd.f32 %v312, %v378
    %v409 = vadd.f32 %v315, %v378
    %v410 = vadd.f32 %v318, %v378
    %v411 = vperm.slane %v361, 0
    %v412 = vlaneseq
    %v413 = vshrl.u32 %v412, 7
    %415 = vset.pattern.permute.xlu0 %v413
    %416 = vperm.xlu0 %415, %v411
    %v417 = vpop.permute.xlu0 %416
    %v418 = vlaneseq
    %v419 = vshrl.u32 %v418, 7
    %v420 = vadd.s32 %v419, 8
    %421 = vset.pattern.permute.xlu0 %v420
    %422 = vperm.xlu0 %421, %v411
    %v423 = vpop.permute.xlu0 %422
    %v424 = vlaneseq
    %v425 = vshrl.u32 %v424, 7
    %v426 = vadd.s32 %v425, 16
    %427 = vset.pattern.permute.xlu0 %v426
    %428 = vperm.xlu0 %427, %v411
    %v429 = vpop.permute.xlu0 %428
    %v430 = vperm.slane %v361, 1
    %v431 = vlaneseq
    %v432 = vshrl.u32 %v431, 7
    %434 = vset.pattern.permute.xlu0 %v432
    %435 = vperm.xlu0 %434, %v430
    %v436 = vpop.permute.xlu0 %435
    %v437 = vlaneseq
    %v438 = vshrl.u32 %v437, 7
    %v439 = vadd.s32 %v438, 8
    %440 = vset.pattern.permute.xlu0 %v439
    %441 = vperm.xlu0 %440, %v430
    %v442 = vpop.permute.xlu0 %441
    %v443 = vlaneseq
    %v444 = vshrl.u32 %v443, 7
    %v445 = vadd.s32 %v444, 16
    %446 = vset.pattern.permute.xlu0 %v445
    %447 = vperm.xlu0 %446, %v430
    %v448 = vpop.permute.xlu0 %447
    %v449 = vperm.slane %v361, 2
    %v450 = vlaneseq
    %v451 = vshrl.u32 %v450, 7
    %453 = vset.pattern.permute.xlu0 %v451
    %454 = vperm.xlu0 %453, %v449
    %v455 = vpop.permute.xlu0 %454
    %v456 = vlaneseq
    %v457 = vshrl.u32 %v456, 7
    %v458 = vadd.s32 %v457, 8
    %459 = vset.pattern.permute.xlu0 %v458
    %460 = vperm.xlu0 %459, %v449
    %v461 = vpop.permute.xlu0 %460
    %v462 = vlaneseq
    %v463 = vshrl.u32 %v462, 7
    %v464 = vadd.s32 %v463, 16
    %465 = vset.pattern.permute.xlu0 %v464
    %466 = vperm.xlu0 %465, %v449
    %v467 = vpop.permute.xlu0 %466
    %v468 = vperm.slane %v361, 3
    %v469 = vlaneseq
    %v470 = vshrl.u32 %v469, 7
    %472 = vset.pattern.permute.xlu0 %v470
    %473 = vperm.xlu0 %472, %v468
    %v474 = vpop.permute.xlu0 %473
    %v475 = vlaneseq
    %v476 = vshrl.u32 %v475, 7
    %v477 = vadd.s32 %v476, 8
    %478 = vset.pattern.permute.xlu0 %v477
    %479 = vperm.xlu0 %478, %v468
    %v480 = vpop.permute.xlu0 %479
    %v481 = vlaneseq
    %v482 = vshrl.u32 %v481, 7
    %v483 = vadd.s32 %v482, 16
    %484 = vset.pattern.permute.xlu0 %v483
    %485 = vperm.xlu0 %484, %v468
    %v486 = vpop.permute.xlu0 %485
    %v487 = vperm.slane %v361, 4
    %v488 = vlaneseq
    %v489 = vshrl.u32 %v488, 7
    %491 = vset.pattern.permute.xlu0 %v489
    %492 = vperm.xlu0 %491, %v487
    %v493 = vpop.permute.xlu0 %492
    %v494 = vlaneseq
    %v495 = vshrl.u32 %v494, 7
    %v496 = vadd.s32 %v495, 8
    %497 = vset.pattern.permute.xlu0 %v496
    %498 = vperm.xlu0 %497, %v487
    %v499 = vpop.permute.xlu0 %498
    %v500 = vlaneseq
    %v501 = vshrl.u32 %v500, 7
    %v502 = vadd.s32 %v501, 16
    %503 = vset.pattern.permute.xlu0 %v502
    %504 = vperm.xlu0 %503, %v487
    %v505 = vpop.permute.xlu0 %504
    %v506 = vperm.slane %v361, 5
    %v507 = vlaneseq
    %v508 = vshrl.u32 %v507, 7
    %510 = vset.pattern.permute.xlu0 %v508
    %511 = vperm.xlu0 %510, %v506
    %v512 = vpop.permute.xlu0 %511
    %v513 = vlaneseq
    %v514 = vshrl.u32 %v513, 7
    %v515 = vadd.s32 %v514, 8
    %516 = vset.pattern.permute.xlu0 %v515
    %517 = vperm.xlu0 %516, %v506
    %v518 = vpop.permute.xlu0 %517
    %v519 = vlaneseq
    %v520 = vshrl.u32 %v519, 7
    %v521 = vadd.s32 %v520, 16
    %522 = vset.pattern.permute.xlu0 %v521
    %523 = vperm.xlu0 %522, %v506
    %v524 = vpop.permute.xlu0 %523
    %v525 = vperm.slane %v361, 6
    %v526 = vlaneseq
    %v527 = vshrl.u32 %v526, 7
    %529 = vset.pattern.permute.xlu0 %v527
    %530 = vperm.xlu0 %529, %v525
    %v531 = vpop.permute.xlu0 %530
    %v532 = vlaneseq
    %v533 = vshrl.u32 %v532, 7
    %v534 = vadd.s32 %v533, 8
    %535 = vset.pattern.permute.xlu0 %v534
    %536 = vperm.xlu0 %535, %v525
    %v537 = vpop.permute.xlu0 %536
    %v538 = vlaneseq
    %v539 = vshrl.u32 %v538, 7
    %v540 = vadd.s32 %v539, 16
    %541 = vset.pattern.permute.xlu0 %v540
    %542 = vperm.xlu0 %541, %v525
    %v543 = vpop.permute.xlu0 %542
    %v544 = vperm.slane %v361, 7
    %v545 = vlaneseq
    %v546 = vshrl.u32 %v545, 7
    %548 = vset.pattern.permute.xlu0 %v546
    %549 = vperm.xlu0 %548, %v544
    %v550 = vpop.permute.xlu0 %549
    %v551 = vlaneseq
    %v552 = vshrl.u32 %v551, 7
    %v553 = vadd.s32 %v552, 8
    %554 = vset.pattern.permute.xlu0 %v553
    %555 = vperm.xlu0 %554, %v544
    %v556 = vpop.permute.xlu0 %555
    %v557 = vlaneseq
    %v558 = vshrl.u32 %v557, 7
    %v559 = vadd.s32 %v558, 16
    %560 = vset.pattern.permute.xlu0 %v559
    %561 = vperm.xlu0 %560, %v544
    %v562 = vpop.permute.xlu0 %561
    %v563 = vperm.slane %v348, 0
    %v564 = vmul.f32 %v417, %v563
    %v565 = vmul.f32 %v423, %v563
    %v566 = vmul.f32 %v429, %v563
    %v567 = vmul.f32 %v436, %v563
    %v568 = vmul.f32 %v442, %v563
    %v569 = vmul.f32 %v448, %v563
    %v570 = vmul.f32 %v455, %v563
    %v571 = vmul.f32 %v461, %v563
    %v572 = vmul.f32 %v467, %v563
    %v573 = vmul.f32 %v474, %v563
    %v574 = vmul.f32 %v480, %v563
    %v575 = vmul.f32 %v486, %v563
    %v576 = vmul.f32 %v493, %v563
    %v577 = vmul.f32 %v499, %v563
    %v578 = vmul.f32 %v505, %v563
    %v579 = vmul.f32 %v512, %v563
    %v580 = vmul.f32 %v518, %v563
    %v581 = vmul.f32 %v524, %v563
    %v582 = vmul.f32 %v531, %v563
    %v583 = vmul.f32 %v537, %v563
    %v584 = vmul.f32 %v543, %v563
    %v585 = vmul.f32 %v550, %v563
    %v586 = vmul.f32 %v556, %v563
    %v587 = vmul.f32 %v562, %v563
    %v588 = vadd.f32 %v387, %v564
    %v589 = vadd.f32 %v388, %v565
    %v590 = vadd.f32 %v389, %v566
    %v591 = vadd.f32 %v390, %v567
    %v592 = vadd.f32 %v391, %v568
    %v593 = vadd.f32 %v392, %v569
    %v594 = vadd.f32 %v393, %v570
    %v595 = vadd.f32 %v394, %v571
    %v596 = vadd.f32 %v395, %v572
    %v597 = vadd.f32 %v396, %v573
    %v598 = vadd.f32 %v397, %v574
    %v599 = vadd.f32 %v398, %v575
    %v600 = vadd.f32 %v399, %v576
    %v601 = vadd.f32 %v400, %v577
    %v602 = vadd.f32 %v401, %v578
    %v603 = vadd.f32 %v402, %v579
    %v604 = vadd.f32 %v403, %v580
    %v605 = vadd.f32 %v404, %v581
    %v606 = vadd.f32 %v405, %v582
    %v607 = vadd.f32 %v406, %v583
    %v608 = vadd.f32 %v407, %v584
    %v609 = vadd.f32 %v408, %v585
    %v610 = vadd.f32 %v409, %v586
    %v611 = vadd.f32 %v410, %v587
    %vm612 = vcmp.gt.f32.partialorder %v588, 0.0
    %vm613 = vcmp.gt.f32.partialorder %v589, 0.0
    %vm614 = vcmp.gt.f32.partialorder %v590, 0.0
    %vm615 = vcmp.gt.f32.partialorder %v591, 0.0
    %vm616 = vcmp.gt.f32.partialorder %v592, 0.0
    %vm617 = vcmp.gt.f32.partialorder %v593, 0.0
    %vm618 = vcmp.gt.f32.partialorder %v594, 0.0
    %vm619 = vcmp.gt.f32.partialorder %v595, 0.0
    %vm620 = vcmp.gt.f32.partialorder %v596, 0.0
    %vm621 = vcmp.gt.f32.partialorder %v597, 0.0
    %vm622 = vcmp.gt.f32.partialorder %v598, 0.0
    %vm623 = vcmp.gt.f32.partialorder %v599, 0.0
    %vm624 = vcmp.gt.f32.partialorder %v600, 0.0
    %vm625 = vcmp.gt.f32.partialorder %v601, 0.0
    %vm626 = vcmp.gt.f32.partialorder %v602, 0.0
    %vm627 = vcmp.gt.f32.partialorder %v603, 0.0
    %vm628 = vcmp.gt.f32.partialorder %v604, 0.0
    %vm629 = vcmp.gt.f32.partialorder %v605, 0.0
    %vm630 = vcmp.gt.f32.partialorder %v606, 0.0
    %vm631 = vcmp.gt.f32.partialorder %v607, 0.0
    %vm632 = vcmp.gt.f32.partialorder %v608, 0.0
    %vm633 = vcmp.gt.f32.partialorder %v609, 0.0
    %vm634 = vcmp.gt.f32.partialorder %v610, 0.0
    %vm635 = vcmp.gt.f32.partialorder %v611, 0.0
    %v636 = vmul.f32 %v588, 0.2
    %v637 = vmul.f32 %v589, 0.2
    %v638 = vmul.f32 %v590, 0.2
    %v639 = vmul.f32 %v591, 0.2
    %v640 = vmul.f32 %v592, 0.2
    %v641 = vmul.f32 %v593, 0.2
    %v642 = vmul.f32 %v594, 0.2
    %v643 = vmul.f32 %v595, 0.2
    %v644 = vmul.f32 %v596, 0.2
    %v645 = vmul.f32 %v597, 0.2
    %v646 = vmul.f32 %v598, 0.2
    %v647 = vmul.f32 %v599, 0.2
    %v648 = vmul.f32 %v600, 0.2
    %v649 = vmul.f32 %v601, 0.2
    %v650 = vmul.f32 %v602, 0.2
    %v651 = vmul.f32 %v603, 0.2
    %v652 = vmul.f32 %v604, 0.2
    %v653 = vmul.f32 %v605, 0.2
    %v654 = vmul.f32 %v606, 0.2
    %v655 = vmul.f32 %v607, 0.2
    %v656 = vmul.f32 %v608, 0.2
    %v657 = vmul.f32 %v609, 0.2
    %v658 = vmul.f32 %v610, 0.2
    %v659 = vmul.f32 %v611, 0.2
    %v660 = vsel %vm612, %v588, %v636
    %v661 = vsel %vm613, %v589, %v637
    %v662 = vsel %vm614, %v590, %v638
    %v663 = vsel %vm615, %v591, %v639
    %v664 = vsel %vm616, %v592, %v640
    %v665 = vsel %vm617, %v593, %v641
    %v666 = vsel %vm618, %v594, %v642
    %v667 = vsel %vm619, %v595, %v643
    %v668 = vsel %vm620, %v596, %v644
    %v669 = vsel %vm621, %v597, %v645
    %v670 = vsel %vm622, %v598, %v646
    %v671 = vsel %vm623, %v599, %v647
    %v672 = vsel %vm624, %v600, %v648
    %v673 = vsel %vm625, %v601, %v649
    %v674 = vsel %vm626, %v602, %v650
    %v675 = vsel %vm627, %v603, %v651
    %v676 = vsel %vm628, %v604, %v652
    %v677 = vsel %vm629, %v605, %v653
    %v678 = vsel %vm630, %v606, %v654
    %v679 = vsel %vm631, %v607, %v655
    %v680 = vsel %vm632, %v608, %v656
    %v681 = vsel %vm633, %v609, %v657
    %v682 = vsel %vm634, %v610, %v658
    %v683 = vsel %vm635, %v611, %v659
    %v684 = vperm.slane %v349, 0
    %v685 = vmul.f32 %v660, %v684
    %v686 = vmul.f32 %v661, %v684
    %v687 = vmul.f32 %v662, %v684
    %v688 = vmul.f32 %v663, %v684
    %v689 = vmul.f32 %v664, %v684
    %v690 = vmul.f32 %v665, %v684
    %v691 = vmul.f32 %v666, %v684
    %v692 = vmul.f32 %v667, %v684
    %v693 = vmul.f32 %v668, %v684
    %v694 = vmul.f32 %v669, %v684
    %v695 = vmul.f32 %v670, %v684
    %v696 = vmul.f32 %v671, %v684
    %v697 = vmul.f32 %v672, %v684
    %v698 = vmul.f32 %v673, %v684
    %v699 = vmul.f32 %v674, %v684
    %v700 = vmul.f32 %v675, %v684
    %v701 = vmul.f32 %v676, %v684
    %v702 = vmul.f32 %v677, %v684
    %v703 = vmul.f32 %v678, %v684
    %v704 = vmul.f32 %v679, %v684
    %v705 = vmul.f32 %v680, %v684
    %v706 = vmul.f32 %v681, %v684
    %v707 = vmul.f32 %v682, %v684
    %v708 = vmul.f32 %v683, %v684
    %v709 = vsel %vm168, %v685, 0.0
    %710 = vadd.xlane.f32.xlu0 %v709
    %v711 = vpop.xlane.xlu0 %710
    %v712 = vsel %vm168, %v686, 0.0
    %713 = vadd.xlane.f32.xlu0 %v712
    %v714 = vpop.xlane.xlu0 %713
    %v715 = vsel %vm168, %v687, 0.0
    %716 = vadd.xlane.f32.xlu0 %v715
    %v717 = vpop.xlane.xlu0 %716
    %v718 = vsel %vm168, %v688, 0.0
    %719 = vadd.xlane.f32.xlu0 %v718
    %v720 = vpop.xlane.xlu0 %719
    %v721 = vsel %vm168, %v689, 0.0
    %722 = vadd.xlane.f32.xlu0 %v721
    %v723 = vpop.xlane.xlu0 %722
    %v724 = vsel %vm168, %v690, 0.0
    %725 = vadd.xlane.f32.xlu0 %v724
    %v726 = vpop.xlane.xlu0 %725
    %v727 = vsel %vm168, %v691, 0.0
    %728 = vadd.xlane.f32.xlu0 %v727
    %v729 = vpop.xlane.xlu0 %728
    %v730 = vsel %vm168, %v692, 0.0
    %731 = vadd.xlane.f32.xlu0 %v730
    %v732 = vpop.xlane.xlu0 %731
    %v733 = vsel %vm168, %v693, 0.0
    %734 = vadd.xlane.f32.xlu0 %v733
    %v735 = vpop.xlane.xlu0 %734
    %v736 = vsel %vm168, %v694, 0.0
    %737 = vadd.xlane.f32.xlu0 %v736
    %v738 = vpop.xlane.xlu0 %737
    %v739 = vsel %vm168, %v695, 0.0
    %740 = vadd.xlane.f32.xlu0 %v739
    %v741 = vpop.xlane.xlu0 %740
    %v742 = vsel %vm168, %v696, 0.0
    %743 = vadd.xlane.f32.xlu0 %v742
    %v744 = vpop.xlane.xlu0 %743
    %v745 = vsel %vm168, %v697, 0.0
    %746 = vadd.xlane.f32.xlu0 %v745
    %v747 = vpop.xlane.xlu0 %746
    %v748 = vsel %vm168, %v698, 0.0
    %749 = vadd.xlane.f32.xlu0 %v748
    %v750 = vpop.xlane.xlu0 %749
    %v751 = vsel %vm168, %v699, 0.0
    %752 = vadd.xlane.f32.xlu0 %v751
    %v753 = vpop.xlane.xlu0 %752
    %v754 = vsel %vm168, %v700, 0.0
    %755 = vadd.xlane.f32.xlu0 %v754
    %v756 = vpop.xlane.xlu0 %755
    %v757 = vsel %vm168, %v701, 0.0
    %758 = vadd.xlane.f32.xlu0 %v757
    %v759 = vpop.xlane.xlu0 %758
    %v760 = vsel %vm168, %v702, 0.0
    %761 = vadd.xlane.f32.xlu0 %v760
    %v762 = vpop.xlane.xlu0 %761
    %v763 = vsel %vm168, %v703, 0.0
    %764 = vadd.xlane.f32.xlu0 %v763
    %v765 = vpop.xlane.xlu0 %764
    %v766 = vsel %vm168, %v704, 0.0
    %767 = vadd.xlane.f32.xlu0 %v766
    %v768 = vpop.xlane.xlu0 %767
    %v769 = vsel %vm168, %v705, 0.0
    %770 = vadd.xlane.f32.xlu0 %v769
    %v771 = vpop.xlane.xlu0 %770
    %v772 = vsel %vm168, %v706, 0.0
    %773 = vadd.xlane.f32.xlu0 %v772
    %v774 = vpop.xlane.xlu0 %773
    %v775 = vsel %vm168, %v707, 0.0
    %776 = vadd.xlane.f32.xlu0 %v775
    %v777 = vpop.xlane.xlu0 %776
    %v778 = vsel %vm168, %v708, 0.0
    %779 = vadd.xlane.f32.xlu0 %v778
    %v780 = vpop.xlane.xlu0 %779
    %vm781 = vcmp.gt.f32.partialorder %v362, 0.0
    %v806 = vlaneseq
    %v807 = vand.u32 %v806, 127
    %v808 = vperm.slane %v711, %v807
    %v809 = vadd.s32 %v807, 4294967288
    %v810 = vperm.slane %v714, %v809
    %vm811 = vcmask 130112
    %v812 = vsel %vm811, %v810, %v808
    %v813 = vadd.s32 %v807, 4294967280
    %v814 = vperm.slane %v717, %v813
    %vm815 = vcmask 195712
    %v816 = vsel %vm815, %v814, %v812
    %v817 = vperm.slane %v720, %v807
    %v818 = vperm.slane %v723, %v809
    %v819 = vsel %vm811, %v818, %v817
    %v820 = vperm.slane %v726, %v813
    %v821 = vsel %vm815, %v820, %v819
    %v822 = vperm.slane %v729, %v807
    %v823 = vperm.slane %v732, %v809
    %v824 = vsel %vm811, %v823, %v822
    %v825 = vperm.slane %v735, %v813
    %v826 = vsel %vm815, %v825, %v824
    %v827 = vperm.slane %v738, %v807
    %v828 = vperm.slane %v741, %v809
    %v829 = vsel %vm811, %v828, %v827
    %v830 = vperm.slane %v744, %v813
    %v831 = vsel %vm815, %v830, %v829
    %v832 = vperm.slane %v747, %v807
    %v833 = vperm.slane %v750, %v809
    %v834 = vsel %vm811, %v833, %v832
    %v835 = vperm.slane %v753, %v813
    %v836 = vsel %vm815, %v835, %v834
    %v837 = vperm.slane %v756, %v807
    %v838 = vperm.slane %v759, %v809
    %v839 = vsel %vm811, %v838, %v837
    %v840 = vperm.slane %v762, %v813
    %v841 = vsel %vm815, %v840, %v839
    %v842 = vperm.slane %v765, %v807
    %v843 = vperm.slane %v768, %v809
    %v844 = vsel %vm811, %v843, %v842
    %v845 = vperm.slane %v771, %v813
    %v846 = vsel %vm815, %v845, %v844
    %v847 = vperm.slane %v774, %v807
    %v848 = vperm.slane %v777, %v809
    %v849 = vsel %vm811, %v848, %v847
    %v850 = vperm.slane %v780, %v813
    %v851 = vsel %vm815, %v850, %v849
    %vm852 = vcmask 1041409
    %v853 = vsel %vm852, %v821, %v816
    %vm854 = vcmask 1042434
    %v855 = vsel %vm854, %v826, %v853
    %vm856 = vcmask 1043459
    %v857 = vsel %vm856, %v831, %v855
    %vm858 = vcmask 1044484
    %v859 = vsel %vm858, %v836, %v857
    %vm860 = vcmask 1045509
    %v861 = vsel %vm860, %v841, %v859
    %vm862 = vcmask 1046534
    %v863 = vsel %vm862, %v846, %v861
    %vm864 = vcmask 1047559
    %v865 = vsel %vm864, %v851, %v863
    %v867 = vsel %vm781, %v865, -1e+30
    %v868 = vsel %vm85, %v867, -inf
    %869 = vmax.xlane.f32.xlu0 %v868
    %v870 = vpop.xlane.xlu0 %869
    %v871 = vsub.f32 %v867, %v870
    %v872 = vmul.f32 %v871, 1.442695
    %v873 = vpow.pop %v872
    %v874 = vsel %vm781, %v873, 0.0
    %v875 = vsel %vm85, %v874, 0.0
    %876 = vadd.xlane.f32.xlu0 %v875
    %v877 = vpop.xlane.xlu0 %876
    %v878 = vrcp.pop %v877
    %v879 = vmul.f32 %v877, %v878
    %v880 = vsub.f32 1.0, %v879
    %v881 = vmul.f32 %v878, %v880
    %v882 = vadd.f32 %v878, %v881
    %vm883 = vweird.f32 %v877
    %vm884 = vweird.f32 %v878
    %vm885 = vmor %vm883, %vm884
    %v886 = vsel %vm885, %v878, %v882
    %v887 = vand.u32 2147483647, %v877
    %vm888 = vcmp.eq.f32.partialorder %v887, 8.507059e+37
    %v889 = vand.u32 %v877, 2147483648
    %v890 = vor.u32 1.1754944e-38, %v889
    %v891 = vsel %vm888, %v890, %v886
    %v892 = vmul.f32 %v874, %v891
    %v893 = vperm.slane %v350, 0
    %v894 = vmul.f32 %v660, %v893
    %v895 = vmul.f32 %v661, %v893
    %v896 = vmul.f32 %v662, %v893
    %v897 = vmul.f32 %v663, %v893
    %v898 = vmul.f32 %v664, %v893
    %v899 = vmul.f32 %v665, %v893
    %v900 = vmul.f32 %v666, %v893
    %v901 = vmul.f32 %v667, %v893
    %v902 = vmul.f32 %v668, %v893
    %v903 = vmul.f32 %v669, %v893
    %v904 = vmul.f32 %v670, %v893
    %v905 = vmul.f32 %v671, %v893
    %v906 = vmul.f32 %v672, %v893
    %v907 = vmul.f32 %v673, %v893
    %v908 = vmul.f32 %v674, %v893
    %v909 = vmul.f32 %v675, %v893
    %v910 = vmul.f32 %v676, %v893
    %v911 = vmul.f32 %v677, %v893
    %v912 = vmul.f32 %v678, %v893
    %v913 = vmul.f32 %v679, %v893
    %v914 = vmul.f32 %v680, %v893
    %v915 = vmul.f32 %v681, %v893
    %v916 = vmul.f32 %v682, %v893
    %v917 = vmul.f32 %v683, %v893
    %v918 = vsel %vm168, %v894, 0.0
    %919 = vadd.xlane.f32.xlu0 %v918
    %v920 = vpop.xlane.xlu0 %919
    %v921 = vsel %vm168, %v895, 0.0
    %922 = vadd.xlane.f32.xlu0 %v921
    %v923 = vpop.xlane.xlu0 %922
    %v924 = vsel %vm168, %v896, 0.0
    %925 = vadd.xlane.f32.xlu0 %v924
    %v926 = vpop.xlane.xlu0 %925
    %v927 = vsel %vm168, %v897, 0.0
    %928 = vadd.xlane.f32.xlu0 %v927
    %v929 = vpop.xlane.xlu0 %928
    %v930 = vsel %vm168, %v898, 0.0
    %931 = vadd.xlane.f32.xlu0 %v930
    %v932 = vpop.xlane.xlu0 %931
    %v933 = vsel %vm168, %v899, 0.0
    %934 = vadd.xlane.f32.xlu0 %v933
    %v935 = vpop.xlane.xlu0 %934
    %v936 = vsel %vm168, %v900, 0.0
    %937 = vadd.xlane.f32.xlu0 %v936
    %v938 = vpop.xlane.xlu0 %937
    %v939 = vsel %vm168, %v901, 0.0
    %940 = vadd.xlane.f32.xlu0 %v939
    %v941 = vpop.xlane.xlu0 %940
    %v942 = vsel %vm168, %v902, 0.0
    %943 = vadd.xlane.f32.xlu0 %v942
    %v944 = vpop.xlane.xlu0 %943
    %v945 = vsel %vm168, %v903, 0.0
    %946 = vadd.xlane.f32.xlu0 %v945
    %v947 = vpop.xlane.xlu0 %946
    %v948 = vsel %vm168, %v904, 0.0
    %949 = vadd.xlane.f32.xlu0 %v948
    %v950 = vpop.xlane.xlu0 %949
    %v951 = vsel %vm168, %v905, 0.0
    %952 = vadd.xlane.f32.xlu0 %v951
    %v953 = vpop.xlane.xlu0 %952
    %v954 = vsel %vm168, %v906, 0.0
    %955 = vadd.xlane.f32.xlu0 %v954
    %v956 = vpop.xlane.xlu0 %955
    %v957 = vsel %vm168, %v907, 0.0
    %958 = vadd.xlane.f32.xlu0 %v957
    %v959 = vpop.xlane.xlu0 %958
    %v960 = vsel %vm168, %v908, 0.0
    %961 = vadd.xlane.f32.xlu0 %v960
    %v962 = vpop.xlane.xlu0 %961
    %v963 = vsel %vm168, %v909, 0.0
    %964 = vadd.xlane.f32.xlu0 %v963
    %v965 = vpop.xlane.xlu0 %964
    %v966 = vsel %vm168, %v910, 0.0
    %967 = vadd.xlane.f32.xlu0 %v966
    %v968 = vpop.xlane.xlu0 %967
    %v969 = vsel %vm168, %v911, 0.0
    %970 = vadd.xlane.f32.xlu0 %v969
    %v971 = vpop.xlane.xlu0 %970
    %v972 = vsel %vm168, %v912, 0.0
    %973 = vadd.xlane.f32.xlu0 %v972
    %v974 = vpop.xlane.xlu0 %973
    %v975 = vsel %vm168, %v913, 0.0
    %976 = vadd.xlane.f32.xlu0 %v975
    %v977 = vpop.xlane.xlu0 %976
    %v978 = vsel %vm168, %v914, 0.0
    %979 = vadd.xlane.f32.xlu0 %v978
    %v980 = vpop.xlane.xlu0 %979
    %v981 = vsel %vm168, %v915, 0.0
    %982 = vadd.xlane.f32.xlu0 %v981
    %v983 = vpop.xlane.xlu0 %982
    %v984 = vsel %vm168, %v916, 0.0
    %985 = vadd.xlane.f32.xlu0 %v984
    %v986 = vpop.xlane.xlu0 %985
    %v987 = vsel %vm168, %v917, 0.0
    %988 = vadd.xlane.f32.xlu0 %v987
    %v989 = vpop.xlane.xlu0 %988
    %v1014 = vperm.slane %v920, %v807
    %v1015 = vperm.slane %v923, %v809
    %v1016 = vsel %vm811, %v1015, %v1014
    %v1017 = vperm.slane %v926, %v813
    %v1018 = vsel %vm815, %v1017, %v1016
    %v1019 = vperm.slane %v929, %v807
    %v1020 = vperm.slane %v932, %v809
    %v1021 = vsel %vm811, %v1020, %v1019
    %v1022 = vperm.slane %v935, %v813
    %v1023 = vsel %vm815, %v1022, %v1021
    %v1024 = vperm.slane %v938, %v807
    %v1025 = vperm.slane %v941, %v809
    %v1026 = vsel %vm811, %v1025, %v1024
    %v1027 = vperm.slane %v944, %v813
    %v1028 = vsel %vm815, %v1027, %v1026
    %v1029 = vperm.slane %v947, %v807
    %v1030 = vperm.slane %v950, %v809
    %v1031 = vsel %vm811, %v1030, %v1029
    %v1032 = vperm.slane %v953, %v813
    %v1033 = vsel %vm815, %v1032, %v1031
    %v1034 = vperm.slane %v956, %v807
    %v1035 = vperm.slane %v959, %v809
    %v1036 = vsel %vm811, %v1035, %v1034
    %v1037 = vperm.slane %v962, %v813
    %v1038 = vsel %vm815, %v1037, %v1036
    %v1039 = vperm.slane %v965, %v807
    %v1040 = vperm.slane %v968, %v809
    %v1041 = vsel %vm811, %v1040, %v1039
    %v1042 = vperm.slane %v971, %v813
    %v1043 = vsel %vm815, %v1042, %v1041
    %v1044 = vperm.slane %v974, %v807
    %v1045 = vperm.slane %v977, %v809
    %v1046 = vsel %vm811, %v1045, %v1044
    %v1047 = vperm.slane %v980, %v813
    %v1048 = vsel %vm815, %v1047, %v1046
    %v1049 = vperm.slane %v983, %v807
    %v1050 = vperm.slane %v986, %v809
    %v1051 = vsel %vm811, %v1050, %v1049
    %v1052 = vperm.slane %v989, %v813
    %v1053 = vsel %vm815, %v1052, %v1051
    %v1054 = vsel %vm852, %v1023, %v1018
    %v1055 = vsel %vm854, %v1028, %v1054
    %v1056 = vsel %vm856, %v1033, %v1055
    %v1057 = vsel %vm858, %v1038, %v1056
    %v1058 = vsel %vm860, %v1043, %v1057
    %v1059 = vsel %vm862, %v1048, %v1058
    %v1060 = vsel %vm864, %v1053, %v1059
    %v1062 = vsel %vm781, %v1060, -1e+30
    %v1063 = vsel %vm85, %v1062, -inf
    %1064 = vmax.xlane.f32.xlu0 %v1063
    %v1065 = vpop.xlane.xlu0 %1064
    %v1066 = vsub.f32 %v1062, %v1065
    %v1067 = vmul.f32 %v1066, 1.442695
    %v1068 = vpow.pop %v1067
    %v1069 = vsel %vm781, %v1068, 0.0
    %v1070 = vsel %vm85, %v1069, 0.0
    %1071 = vadd.xlane.f32.xlu0 %v1070
    %v1072 = vpop.xlane.xlu0 %1071
    %v1073 = vrcp.pop %v1072
    %v1074 = vmul.f32 %v1072, %v1073
    %v1075 = vsub.f32 1.0, %v1074
    %v1076 = vmul.f32 %v1073, %v1075
    %v1077 = vadd.f32 %v1073, %v1076
    %vm1078 = vweird.f32 %v1072
    %vm1079 = vweird.f32 %v1073
    %vm1080 = vmor %vm1078, %vm1079
    %v1081 = vsel %vm1080, %v1073, %v1077
    %v1082 = vand.u32 2147483647, %v1072
    %vm1083 = vcmp.eq.f32.partialorder %v1082, 8.507059e+37
    %v1084 = vand.u32 %v1072, 2147483648
    %v1085 = vor.u32 1.1754944e-38, %v1084
    %v1086 = vsel %vm1083, %v1085, %v1081
    %v1087 = vmul.f32 %v1069, %v1086
    %v1089 = vsel %vm85, %v1087, 0
    %1091 = vmatpush.msra.mxu0 0.0
    %1092 = vmatpush.msra.mxu0 0.0
    %1093 = vmatpush.msra.mxu0 0.0
    %1094 = vmatpush.msra.mxu0 0.0
    %1095 = vmatpush.msra.mxu0 0.0
    %1096 = vmatpush.msra.mxu0 0.0
    %1097 = vmatpush.msra.mxu0 0.0
    %1098 = vmatpush.msra.mxu0 0.0
    %1099 = vmatpush.msra.mxu0 0.0
    %1100 = vmatpush.msra.mxu0 0.0
    %1101 = vmatpush.msra.mxu0 0.0
    %1102 = vmatpush.msra.mxu0 0.0
    %1103 = vmatpush.msra.mxu0 0.0
    %1104 = vmatpush.msra.mxu0 %v360
    %1105 = vmatpush.msra.mxu0 %v359
    %1106 = vmatpush.msra.mxu0 %v358
    %1107 = vmatmul.f32.gmra.mxu0 %v1089
    %v1108 = vpop.f32.mrf.mxu0
    %v1109 = vadd.f32 0.0, %v1108
    %1110 = vdwg.mxu0
    %v1112 = vsel %vm85, %v892, 0
    %1114 = vmatpush.msra.mxu0 0.0
    %1115 = vmatpush.msra.mxu0 0.0
    %1116 = vmatpush.msra.mxu0 0.0
    %1117 = vmatpush.msra.mxu0 0.0
    %1118 = vmatpush.msra.mxu0 0.0
    %1119 = vmatpush.msra.mxu0 0.0
    %1120 = vmatpush.msra.mxu0 0.0
    %1121 = vmatpush.msra.mxu0 0.0
    %1122 = vmatpush.msra.mxu0 0.0
    %1123 = vmatpush.msra.mxu0 0.0
    %1124 = vmatpush.msra.mxu0 0.0
    %1125 = vmatpush.msra.mxu0 0.0
    %1126 = vmatpush.msra.mxu0 0.0
    %1127 = vmatpush.msra.mxu0 %v355
    %1128 = vmatpush.msra.mxu0 %v354
    %1129 = vmatpush.msra.mxu0 %v353
    %1130 = vmatmul.f32.gmra.mxu0 %v1112
    %v1131 = vpop.f32.mrf.mxu0
    %v1132 = vadd.f32 %v1109, %v1131
    %1133 = vdwg.mxu0
    %v1134 = vld [vmem:[%s1 + $0x50] sm:$0xff]
    %v1135 = vld [vmem:[%s1 + $0x38] sm:$0xff]
    %v1137 = vrot.slane %v343, 1
    %v1138 = vrot.slane %v343, 2
    %v1139 = vrot.slane %v343, 3
    %v1140 = vrot.slane %v343, 4
    %v1141 = vrot.slane %v343, 5
    %v1142 = vrot.slane %v343, 6
    %v1143 = vrot.slane %v343, 7
    %v1144 = vperm.slane %v343, 0
    %v1145 = vperm.slane %v1137, 0
    %v1146 = vperm.slane %v1138, 0
    %v1147 = vperm.slane %v1139, 0
    %v1148 = vperm.slane %v1140, 0
    %v1149 = vperm.slane %v1141, 0
    %v1150 = vperm.slane %v1142, 0
    %v1151 = vperm.slane %v1143, 0
    %v1160 = vadd.f32 %v312, %v1144
    %v1161 = vadd.f32 %v315, %v1144
    %v1162 = vadd.f32 %v318, %v1144
    %v1163 = vadd.f32 %v312, %v1145
    %v1164 = vadd.f32 %v315, %v1145
    %v1165 = vadd.f32 %v318, %v1145
    %v1166 = vadd.f32 %v312, %v1146
    %v1167 = vadd.f32 %v315, %v1146
    %v1168 = vadd.f32 %v318, %v1146
    %v1169 = vadd.f32 %v312, %v1147
    %v1170 = vadd.f32 %v315, %v1147
    %v1171 = vadd.f32 %v318, %v1147
    %v1172 = vadd.f32 %v312, %v1148
    %v1173 = vadd.f32 %v315, %v1148
    %v1174 = vadd.f32 %v318, %v1148
    %v1175 = vadd.f32 %v312, %v1149
    %v1176 = vadd.f32 %v315, %v1149
    %v1177 = vadd.f32 %v318, %v1149
    %v1178 = vadd.f32 %v312, %v1150
    %v1179 = vadd.f32 %v315, %v1150
    %v1180 = vadd.f32 %v318, %v1150
    %v1181 = vadd.f32 %v312, %v1151
    %v1182 = vadd.f32 %v315, %v1151
    %v1183 = vadd.f32 %v318, %v1151
    %v1184 = vperm.slane %v1134, 0
    %v1185 = vlaneseq
    %v1186 = vshrl.u32 %v1185, 7
    %1188 = vset.pattern.permute.xlu0 %v1186
    %1189 = vperm.xlu0 %1188, %v1184
    %v1190 = vpop.permute.xlu0 %1189
    %v1191 = vlaneseq
    %v1192 = vshrl.u32 %v1191, 7
    %v1193 = vadd.s32 %v1192, 8
    %1194 = vset.pattern.permute.xlu0 %v1193
    %1195 = vperm.xlu0 %1194, %v1184
    %v1196 = vpop.permute.xlu0 %1195
    %v1197 = vlaneseq
    %v1198 = vshrl.u32 %v1197, 7
    %v1199 = vadd.s32 %v1198, 16
    %1200 = vset.pattern.permute.xlu0 %v1199
    %1201 = vperm.xlu0 %1200, %v1184
    %v1202 = vpop.permute.xlu0 %1201
    %v1203 = vperm.slane %v1134, 1
    %v1204 = vlaneseq
    %v1205 = vshrl.u32 %v1204, 7
    %1207 = vset.pattern.permute.xlu0 %v1205
    %1208 = vperm.xlu0 %1207, %v1203
    %v1209 = vpop.permute.xlu0 %1208
    %v1210 = vlaneseq
    %v1211 = vshrl.u32 %v1210, 7
    %v1212 = vadd.s32 %v1211, 8
    %1213 = vset.pattern.permute.xlu0 %v1212
    %1214 = vperm.xlu0 %1213, %v1203
    %v1215 = vpop.permute.xlu0 %1214
    %v1216 = vlaneseq
    %v1217 = vshrl.u32 %v1216, 7
    %v1218 = vadd.s32 %v1217, 16
    %1219 = vset.pattern.permute.xlu0 %v1218
    %1220 = vperm.xlu0 %1219, %v1203
    %v1221 = vpop.permute.xlu0 %1220
    %v1222 = vperm.slane %v1134, 2
    %v1223 = vlaneseq
    %v1224 = vshrl.u32 %v1223, 7
    %1226 = vset.pattern.permute.xlu0 %v1224
    %1227 = vperm.xlu0 %1226, %v1222
    %v1228 = vpop.permute.xlu0 %1227
    %v1229 = vlaneseq
    %v1230 = vshrl.u32 %v1229, 7
    %v1231 = vadd.s32 %v1230, 8
    %1232 = vset.pattern.permute.xlu0 %v1231
    %1233 = vperm.xlu0 %1232, %v1222
    %v1234 = vpop.permute.xlu0 %1233
    %v1235 = vlaneseq
    %v1236 = vshrl.u32 %v1235, 7
    %v1237 = vadd.s32 %v1236, 16
    %1238 = vset.pattern.permute.xlu0 %v1237
    %1239 = vperm.xlu0 %1238, %v1222
    %v1240 = vpop.permute.xlu0 %1239
    %v1241 = vperm.slane %v1134, 3
    %v1242 = vlaneseq
    %v1243 = vshrl.u32 %v1242, 7
    %1245 = vset.pattern.permute.xlu0 %v1243
    %1246 = vperm.xlu0 %1245, %v1241
    %v1247 = vpop.permute.xlu0 %1246
    %v1248 = vlaneseq
    %v1249 = vshrl.u32 %v1248, 7
    %v1250 = vadd.s32 %v1249, 8
    %1251 = vset.pattern.permute.xlu0 %v1250
    %1252 = vperm.xlu0 %1251, %v1241
    %v1253 = vpop.permute.xlu0 %1252
    %v1254 = vlaneseq
    %v1255 = vshrl.u32 %v1254, 7
    %v1256 = vadd.s32 %v1255, 16
    %1257 = vset.pattern.permute.xlu0 %v1256
    %1258 = vperm.xlu0 %1257, %v1241
    %v1259 = vpop.permute.xlu0 %1258
    %v1260 = vperm.slane %v1134, 4
    %v1261 = vlaneseq
    %v1262 = vshrl.u32 %v1261, 7
    %1264 = vset.pattern.permute.xlu0 %v1262
    %1265 = vperm.xlu0 %1264, %v1260
    %v1266 = vpop.permute.xlu0 %1265
    %v1267 = vlaneseq
    %v1268 = vshrl.u32 %v1267, 7
    %v1269 = vadd.s32 %v1268, 8
    %1270 = vset.pattern.permute.xlu0 %v1269
    %1271 = vperm.xlu0 %1270, %v1260
    %v1272 = vpop.permute.xlu0 %1271
    %v1273 = vlaneseq
    %v1274 = vshrl.u32 %v1273, 7
    %v1275 = vadd.s32 %v1274, 16
    %1276 = vset.pattern.permute.xlu0 %v1275
    %1277 = vperm.xlu0 %1276, %v1260
    %v1278 = vpop.permute.xlu0 %1277
    %v1279 = vperm.slane %v1134, 5
    %v1280 = vlaneseq
    %v1281 = vshrl.u32 %v1280, 7
    %1283 = vset.pattern.permute.xlu0 %v1281
    %1284 = vperm.xlu0 %1283, %v1279
    %v1285 = vpop.permute.xlu0 %1284
    %v1286 = vlaneseq
    %v1287 = vshrl.u32 %v1286, 7
    %v1288 = vadd.s32 %v1287, 8
    %1289 = vset.pattern.permute.xlu0 %v1288
    %1290 = vperm.xlu0 %1289, %v1279
    %v1291 = vpop.permute.xlu0 %1290
    %v1292 = vlaneseq
    %v1293 = vshrl.u32 %v1292, 7
    %v1294 = vadd.s32 %v1293, 16
    %1295 = vset.pattern.permute.xlu0 %v1294
    %1296 = vperm.xlu0 %1295, %v1279
    %v1297 = vpop.permute.xlu0 %1296
    %v1298 = vperm.slane %v1134, 6
    %v1299 = vlaneseq
    %v1300 = vshrl.u32 %v1299, 7
    %1302 = vset.pattern.permute.xlu0 %v1300
    %1303 = vperm.xlu0 %1302, %v1298
    %v1304 = vpop.permute.xlu0 %1303
    %v1305 = vlaneseq
    %v1306 = vshrl.u32 %v1305, 7
    %v1307 = vadd.s32 %v1306, 8
    %1308 = vset.pattern.permute.xlu0 %v1307
    %1309 = vperm.xlu0 %1308, %v1298
    %v1310 = vpop.permute.xlu0 %1309
    %v1311 = vlaneseq
    %v1312 = vshrl.u32 %v1311, 7
    %v1313 = vadd.s32 %v1312, 16
    %1314 = vset.pattern.permute.xlu0 %v1313
    %1315 = vperm.xlu0 %1314, %v1298
    %v1316 = vpop.permute.xlu0 %1315
    %v1317 = vperm.slane %v1134, 7
    %v1318 = vlaneseq
    %v1319 = vshrl.u32 %v1318, 7
    %1321 = vset.pattern.permute.xlu0 %v1319
    %1322 = vperm.xlu0 %1321, %v1317
    %v1323 = vpop.permute.xlu0 %1322
    %v1324 = vlaneseq
    %v1325 = vshrl.u32 %v1324, 7
    %v1326 = vadd.s32 %v1325, 8
    %1327 = vset.pattern.permute.xlu0 %v1326
    %1328 = vperm.xlu0 %1327, %v1317
    %v1329 = vpop.permute.xlu0 %1328
    %v1330 = vlaneseq
    %v1331 = vshrl.u32 %v1330, 7
    %v1332 = vadd.s32 %v1331, 16
    %1333 = vset.pattern.permute.xlu0 %v1332
    %1334 = vperm.xlu0 %1333, %v1317
    %v1335 = vpop.permute.xlu0 %1334
    %v1336 = vmul.f32 %v1190, %v563
    %v1337 = vmul.f32 %v1196, %v563
    %v1338 = vmul.f32 %v1202, %v563
    %v1339 = vmul.f32 %v1209, %v563
    %v1340 = vmul.f32 %v1215, %v563
    %v1341 = vmul.f32 %v1221, %v563
    %v1342 = vmul.f32 %v1228, %v563
    %v1343 = vmul.f32 %v1234, %v563
    %v1344 = vmul.f32 %v1240, %v563
    %v1345 = vmul.f32 %v1247, %v563
    %v1346 = vmul.f32 %v1253, %v563
    %v1347 = vmul.f32 %v1259, %v563
    %v1348 = vmul.f32 %v1266, %v563
    %v1349 = vmul.f32 %v1272, %v563
    %v1350 = vmul.f32 %v1278, %v563
    %v1351 = vmul.f32 %v1285, %v563
    %v1352 = vmul.f32 %v1291, %v563
    %v1353 = vmul.f32 %v1297, %v563
    %v1354 = vmul.f32 %v1304, %v563
    %v1355 = vmul.f32 %v1310, %v563
    %v1356 = vmul.f32 %v1316, %v563
    %v1357 = vmul.f32 %v1323, %v563
    %v1358 = vmul.f32 %v1329, %v563
    %v1359 = vmul.f32 %v1335, %v563
    %v1360 = vadd.f32 %v1160, %v1336
    %v1361 = vadd.f32 %v1161, %v1337
    %v1362 = vadd.f32 %v1162, %v1338
    %v1363 = vadd.f32 %v1163, %v1339
    %v1364 = vadd.f32 %v1164, %v1340
    %v1365 = vadd.f32 %v1165, %v1341
    %v1366 = vadd.f32 %v1166, %v1342
    %v1367 = vadd.f32 %v1167, %v1343
    %v1368 = vadd.f32 %v1168, %v1344
    %v1369 = vadd.f32 %v1169, %v1345
    %v1370 = vadd.f32 %v1170, %v1346
    %v1371 = vadd.f32 %v1171, %v1347
    %v1372 = vadd.f32 %v1172, %v1348
    %v1373 = vadd.f32 %v1173, %v1349
    %v1374 = vadd.f32 %v1174, %v1350
    %v1375 = vadd.f32 %v1175, %v1351
    %v1376 = vadd.f32 %v1176, %v1352
    %v1377 = vadd.f32 %v1177, %v1353
    %v1378 = vadd.f32 %v1178, %v1354
    %v1379 = vadd.f32 %v1179, %v1355
    %v1380 = vadd.f32 %v1180, %v1356
    %v1381 = vadd.f32 %v1181, %v1357
    %v1382 = vadd.f32 %v1182, %v1358
    %v1383 = vadd.f32 %v1183, %v1359
    %vm1384 = vcmp.gt.f32.partialorder %v1360, 0.0
    %vm1385 = vcmp.gt.f32.partialorder %v1361, 0.0
    %vm1386 = vcmp.gt.f32.partialorder %v1362, 0.0
    %vm1387 = vcmp.gt.f32.partialorder %v1363, 0.0
    %vm1388 = vcmp.gt.f32.partialorder %v1364, 0.0
    %vm1389 = vcmp.gt.f32.partialorder %v1365, 0.0
    %vm1390 = vcmp.gt.f32.partialorder %v1366, 0.0
    %vm1391 = vcmp.gt.f32.partialorder %v1367, 0.0
    %vm1392 = vcmp.gt.f32.partialorder %v1368, 0.0
    %vm1393 = vcmp.gt.f32.partialorder %v1369, 0.0
    %vm1394 = vcmp.gt.f32.partialorder %v1370, 0.0
    %vm1395 = vcmp.gt.f32.partialorder %v1371, 0.0
    %vm1396 = vcmp.gt.f32.partialorder %v1372, 0.0
    %vm1397 = vcmp.gt.f32.partialorder %v1373, 0.0
    %vm1398 = vcmp.gt.f32.partialorder %v1374, 0.0
    %vm1399 = vcmp.gt.f32.partialorder %v1375, 0.0
    %vm1400 = vcmp.gt.f32.partialorder %v1376, 0.0
    %vm1401 = vcmp.gt.f32.partialorder %v1377, 0.0
    %vm1402 = vcmp.gt.f32.partialorder %v1378, 0.0
    %vm1403 = vcmp.gt.f32.partialorder %v1379, 0.0
    %vm1404 = vcmp.gt.f32.partialorder %v1380, 0.0
    %vm1405 = vcmp.gt.f32.partialorder %v1381, 0.0
    %vm1406 = vcmp.gt.f32.partialorder %v1382, 0.0
    %vm1407 = vcmp.gt.f32.partialorder %v1383, 0.0
    %v1408 = vmul.f32 %v1360, 0.2
    %v1409 = vmul.f32 %v1361, 0.2
    %v1410 = vmul.f32 %v1362, 0.2
    %v1411 = vmul.f32 %v1363, 0.2
    %v1412 = vmul.f32 %v1364, 0.2
    %v1413 = vmul.f32 %v1365, 0.2
    %v1414 = vmul.f32 %v1366, 0.2
    %v1415 = vmul.f32 %v1367, 0.2
    %v1416 = vmul.f32 %v1368, 0.2
    %v1417 = vmul.f32 %v1369, 0.2
    %v1418 = vmul.f32 %v1370, 0.2
    %v1419 = vmul.f32 %v1371, 0.2
    %v1420 = vmul.f32 %v1372, 0.2
    %v1421 = vmul.f32 %v1373, 0.2
    %v1422 = vmul.f32 %v1374, 0.2
    %v1423 = vmul.f32 %v1375, 0.2
    %v1424 = vmul.f32 %v1376, 0.2
    %v1425 = vmul.f32 %v1377, 0.2
    %v1426 = vmul.f32 %v1378, 0.2
    %v1427 = vmul.f32 %v1379, 0.2
    %v1428 = vmul.f32 %v1380, 0.2
    %v1429 = vmul.f32 %v1381, 0.2
    %v1430 = vmul.f32 %v1382, 0.2
    %v1431 = vmul.f32 %v1383, 0.2
    %v1432 = vsel %vm1384, %v1360, %v1408
    %v1433 = vsel %vm1385, %v1361, %v1409
    %v1434 = vsel %vm1386, %v1362, %v1410
    %v1435 = vsel %vm1387, %v1363, %v1411
    %v1436 = vsel %vm1388, %v1364, %v1412
    %v1437 = vsel %vm1389, %v1365, %v1413
    %v1438 = vsel %vm1390, %v1366, %v1414
    %v1439 = vsel %vm1391, %v1367, %v1415
    %v1440 = vsel %vm1392, %v1368, %v1416
    %v1441 = vsel %vm1393, %v1369, %v1417
    %v1442 = vsel %vm1394, %v1370, %v1418
    %v1443 = vsel %vm1395, %v1371, %v1419
    %v1444 = vsel %vm1396, %v1372, %v1420
    %v1445 = vsel %vm1397, %v1373, %v1421
    %v1446 = vsel %vm1398, %v1374, %v1422
    %v1447 = vsel %vm1399, %v1375, %v1423
    %v1448 = vsel %vm1400, %v1376, %v1424
    %v1449 = vsel %vm1401, %v1377, %v1425
    %v1450 = vsel %vm1402, %v1378, %v1426
    %v1451 = vsel %vm1403, %v1379, %v1427
    %v1452 = vsel %vm1404, %v1380, %v1428
    %v1453 = vsel %vm1405, %v1381, %v1429
    %v1454 = vsel %vm1406, %v1382, %v1430
    %v1455 = vsel %vm1407, %v1383, %v1431
    %v1456 = vmul.f32 %v1432, %v684
    %v1457 = vmul.f32 %v1433, %v684
    %v1458 = vmul.f32 %v1434, %v684
    %v1459 = vmul.f32 %v1435, %v684
    %v1460 = vmul.f32 %v1436, %v684
    %v1461 = vmul.f32 %v1437, %v684
    %v1462 = vmul.f32 %v1438, %v684
    %v1463 = vmul.f32 %v1439, %v684
    %v1464 = vmul.f32 %v1440, %v684
    %v1465 = vmul.f32 %v1441, %v684
    %v1466 = vmul.f32 %v1442, %v684
    %v1467 = vmul.f32 %v1443, %v684
    %v1468 = vmul.f32 %v1444, %v684
    %v1469 = vmul.f32 %v1445, %v684
    %v1470 = vmul.f32 %v1446, %v684
    %v1471 = vmul.f32 %v1447, %v684
    %v1472 = vmul.f32 %v1448, %v684
    %v1473 = vmul.f32 %v1449, %v684
    %v1474 = vmul.f32 %v1450, %v684
    %v1475 = vmul.f32 %v1451, %v684
    %v1476 = vmul.f32 %v1452, %v684
    %v1477 = vmul.f32 %v1453, %v684
    %v1478 = vmul.f32 %v1454, %v684
    %v1479 = vmul.f32 %v1455, %v684
    %v1480 = vsel %vm168, %v1456, 0.0
    %1481 = vadd.xlane.f32.xlu0 %v1480
    %v1482 = vpop.xlane.xlu0 %1481
    %v1483 = vsel %vm168, %v1457, 0.0
    %1484 = vadd.xlane.f32.xlu0 %v1483
    %v1485 = vpop.xlane.xlu0 %1484
    %v1486 = vsel %vm168, %v1458, 0.0
    %1487 = vadd.xlane.f32.xlu0 %v1486
    %v1488 = vpop.xlane.xlu0 %1487
    %v1489 = vsel %vm168, %v1459, 0.0
    %1490 = vadd.xlane.f32.xlu0 %v1489
    %v1491 = vpop.xlane.xlu0 %1490
    %v1492 = vsel %vm168, %v1460, 0.0
    %1493 = vadd.xlane.f32.xlu0 %v1492
    %v1494 = vpop.xlane.xlu0 %1493
    %v1495 = vsel %vm168, %v1461, 0.0
    %1496 = vadd.xlane.f32.xlu0 %v1495
    %v1497 = vpop.xlane.xlu0 %1496
    %v1498 = vsel %vm168, %v1462, 0.0
    %1499 = vadd.xlane.f32.xlu0 %v1498
    %v1500 = vpop.xlane.xlu0 %1499
    %v1501 = vsel %vm168, %v1463, 0.0
    %1502 = vadd.xlane.f32.xlu0 %v1501
    %v1503 = vpop.xlane.xlu0 %1502
    %v1504 = vsel %vm168, %v1464, 0.0
    %1505 = vadd.xlane.f32.xlu0 %v1504
    %v1506 = vpop.xlane.xlu0 %1505
    %v1507 = vsel %vm168, %v1465, 0.0
    %1508 = vadd.xlane.f32.xlu0 %v1507
    %v1509 = vpop.xlane.xlu0 %1508
    %v1510 = vsel %vm168, %v1466, 0.0
    %1511 = vadd.xlane.f32.xlu0 %v1510
    %v1512 = vpop.xlane.xlu0 %1511
    %v1513 = vsel %vm168, %v1467, 0.0
    %1514 = vadd.xlane.f32.xlu0 %v1513
    %v1515 = vpop.xlane.xlu0 %1514
    %v1516 = vsel %vm168, %v1468, 0.0
    %1517 = vadd.xlane.f32.xlu0 %v1516
    %v1518 = vpop.xlane.xlu0 %1517
    %v1519 = vsel %vm168, %v1469, 0.0
    %1520 = vadd.xlane.f32.xlu0 %v1519
    %v1521 = vpop.xlane.xlu0 %1520
    %v1522 = vsel %vm168, %v1470, 0.0
    %1523 = vadd.xlane.f32.xlu0 %v1522
    %v1524 = vpop.xlane.xlu0 %1523
    %v1525 = vsel %vm168, %v1471, 0.0
    %1526 = vadd.xlane.f32.xlu0 %v1525
    %v1527 = vpop.xlane.xlu0 %1526
    %v1528 = vsel %vm168, %v1472, 0.0
    %1529 = vadd.xlane.f32.xlu0 %v1528
    %v1530 = vpop.xlane.xlu0 %1529
    %v1531 = vsel %vm168, %v1473, 0.0
    %1532 = vadd.xlane.f32.xlu0 %v1531
    %v1533 = vpop.xlane.xlu0 %1532
    %v1534 = vsel %vm168, %v1474, 0.0
    %1535 = vadd.xlane.f32.xlu0 %v1534
    %v1536 = vpop.xlane.xlu0 %1535
    %v1537 = vsel %vm168, %v1475, 0.0
    %1538 = vadd.xlane.f32.xlu0 %v1537
    %v1539 = vpop.xlane.xlu0 %1538
    %v1540 = vsel %vm168, %v1476, 0.0
    %1541 = vadd.xlane.f32.xlu0 %v1540
    %v1542 = vpop.xlane.xlu0 %1541
    %v1543 = vsel %vm168, %v1477, 0.0
    %1544 = vadd.xlane.f32.xlu0 %v1543
    %v1545 = vpop.xlane.xlu0 %1544
    %v1546 = vsel %vm168, %v1478, 0.0
    %1547 = vadd.xlane.f32.xlu0 %v1546
    %v1548 = vpop.xlane.xlu0 %1547
    %v1549 = vsel %vm168, %v1479, 0.0
    %1550 = vadd.xlane.f32.xlu0 %v1549
    %v1551 = vpop.xlane.xlu0 %1550
    %vm1552 = vcmp.gt.f32.partialorder %v1135, 0.0
    %v1577 = vperm.slane %v1482, %v807
    %v1578 = vperm.slane %v1485, %v809
    %v1579 = vsel %vm811, %v1578, %v1577
    %v1580 = vperm.slane %v1488, %v813
    %v1581 = vsel %vm815, %v1580, %v1579
    %v1582 = vperm.slane %v1491, %v807
    %v1583 = vperm.slane %v1494, %v809
    %v1584 = vsel %vm811, %v1583, %v1582
    %v1585 = vperm.slane %v1497, %v813
    %v1586 = vsel %vm815, %v1585, %v1584
    %v1587 = vperm.slane %v1500, %v807
    %v1588 = vperm.slane %v1503, %v809
    %v1589 = vsel %vm811, %v1588, %v1587
    %v1590 = vperm.slane %v1506, %v813
    %v1591 = vsel %vm815, %v1590, %v1589
    %v1592 = vperm.slane %v1509, %v807
    %v1593 = vperm.slane %v1512, %v809
    %v1594 = vsel %vm811, %v1593, %v1592
    %v1595 = vperm.slane %v1515, %v813
    %v1596 = vsel %vm815, %v1595, %v1594
    %v1597 = vperm.slane %v1518, %v807
    %v1598 = vperm.slane %v1521, %v809
    %v1599 = vsel %vm811, %v1598, %v1597
    %v1600 = vperm.slane %v1524, %v813
    %v1601 = vsel %vm815, %v1600, %v1599
    %v1602 = vperm.slane %v1527, %v807
    %v1603 = vperm.slane %v1530, %v809
    %v1604 = vsel %vm811, %v1603, %v1602
    %v1605 = vperm.slane %v1533, %v813
    %v1606 = vsel %vm815, %v1605, %v1604
    %v1607 = vperm.slane %v1536, %v807
    %v1608 = vperm.slane %v1539, %v809
    %v1609 = vsel %vm811, %v1608, %v1607
    %v1610 = vperm.slane %v1542, %v813
    %v1611 = vsel %vm815, %v1610, %v1609
    %v1612 = vperm.slane %v1545, %v807
    %v1613 = vperm.slane %v1548, %v809
    %v1614 = vsel %vm811, %v1613, %v1612
    %v1615 = vperm.slane %v1551, %v813
    %v1616 = vsel %vm815, %v1615, %v1614
    %v1617 = vsel %vm852, %v1586, %v1581
    %v1618 = vsel %vm854, %v1591, %v1617
    %v1619 = vsel %vm856, %v1596, %v1618
    %v1620 = vsel %vm858, %v1601, %v1619
    %v1621 = vsel %vm860, %v1606, %v1620
    %v1622 = vsel %vm862, %v1611, %v1621
    %v1623 = vsel %vm864, %v1616, %v1622
    %v1625 = vsel %vm1552, %v1623, -1e+30
    %v1626 = vsel %vm85, %v1625, -inf
    %1627 = vmax.xlane.f32.xlu0 %v1626
    %v1628 = vpop.xlane.xlu0 %1627
    %v1629 = vsub.f32 %v1625, %v1628
    %v1630 = vmul.f32 %v1629, 1.442695
    %v1631 = vpow.pop %v1630
    %v1632 = vsel %vm1552, %v1631, 0.0
    %v1633 = vsel %vm85, %v1632, 0.0
    %1634 = vadd.xlane.f32.xlu0 %v1633
    %v1635 = vpop.xlane.xlu0 %1634
    %v1636 = vrcp.pop %v1635
    %v1637 = vmul.f32 %v1635, %v1636
    %v1638 = vsub.f32 1.0, %v1637
    %v1639 = vmul.f32 %v1636, %v1638
    %v1640 = vadd.f32 %v1636, %v1639
    %vm1641 = vweird.f32 %v1635
    %vm1642 = vweird.f32 %v1636
    %vm1643 = vmor %vm1641, %vm1642
    %v1644 = vsel %vm1643, %v1636, %v1640
    %v1645 = vand.u32 2147483647, %v1635
    %vm1646 = vcmp.eq.f32.partialorder %v1645, 8.507059e+37
    %v1647 = vand.u32 %v1635, 2147483648
    %v1648 = vor.u32 1.1754944e-38, %v1647
    %v1649 = vsel %vm1646, %v1648, %v1644
    %v1650 = vmul.f32 %v1632, %v1649
    %v1651 = vmul.f32 %v1432, %v893
    %v1652 = vmul.f32 %v1433, %v893
    %v1653 = vmul.f32 %v1434, %v893
    %v1654 = vmul.f32 %v1435, %v893
    %v1655 = vmul.f32 %v1436, %v893
    %v1656 = vmul.f32 %v1437, %v893
    %v1657 = vmul.f32 %v1438, %v893
    %v1658 = vmul.f32 %v1439, %v893
    %v1659 = vmul.f32 %v1440, %v893
    %v1660 = vmul.f32 %v1441, %v893
    %v1661 = vmul.f32 %v1442, %v893
    %v1662 = vmul.f32 %v1443, %v893
    %v1663 = vmul.f32 %v1444, %v893
    %v1664 = vmul.f32 %v1445, %v893
    %v1665 = vmul.f32 %v1446, %v893
    %v1666 = vmul.f32 %v1447, %v893
    %v1667 = vmul.f32 %v1448, %v893
    %v1668 = vmul.f32 %v1449, %v893
    %v1669 = vmul.f32 %v1450, %v893
    %v1670 = vmul.f32 %v1451, %v893
    %v1671 = vmul.f32 %v1452, %v893
    %v1672 = vmul.f32 %v1453, %v893
    %v1673 = vmul.f32 %v1454, %v893
    %v1674 = vmul.f32 %v1455, %v893
    %v1675 = vsel %vm168, %v1651, 0.0
    %1676 = vadd.xlane.f32.xlu0 %v1675
    %v1677 = vpop.xlane.xlu0 %1676
    %v1678 = vsel %vm168, %v1652, 0.0
    %1679 = vadd.xlane.f32.xlu0 %v1678
    %v1680 = vpop.xlane.xlu0 %1679
    %v1681 = vsel %vm168, %v1653, 0.0
    %1682 = vadd.xlane.f32.xlu0 %v1681
    %v1683 = vpop.xlane.xlu0 %1682
    %v1684 = vsel %vm168, %v1654, 0.0
    %1685 = vadd.xlane.f32.xlu0 %v1684
    %v1686 = vpop.xlane.xlu0 %1685
    %v1687 = vsel %vm168, %v1655, 0.0
    %1688 = vadd.xlane.f32.xlu0 %v1687
    %v1689 = vpop.xlane.xlu0 %1688
    %v1690 = vsel %vm168, %v1656, 0.0
    %1691 = vadd.xlane.f32.xlu0 %v1690
    %v1692 = vpop.xlane.xlu0 %1691
    %v1693 = vsel %vm168, %v1657, 0.0
    %1694 = vadd.xlane.f32.xlu0 %v1693
    %v1695 = vpop.xlane.xlu0 %1694
    %v1696 = vsel %vm168, %v1658, 0.0
    %1697 = vadd.xlane.f32.xlu0 %v1696
    %v1698 = vpop.xlane.xlu0 %1697
    %v1699 = vsel %vm168, %v1659, 0.0
    %1700 = vadd.xlane.f32.xlu0 %v1699
    %v1701 = vpop.xlane.xlu0 %1700
    %v1702 = vsel %vm168, %v1660, 0.0
    %1703 = vadd.xlane.f32.xlu0 %v1702
    %v1704 = vpop.xlane.xlu0 %1703
    %v1705 = vsel %vm168, %v1661, 0.0
    %1706 = vadd.xlane.f32.xlu0 %v1705
    %v1707 = vpop.xlane.xlu0 %1706
    %v1708 = vsel %vm168, %v1662, 0.0
    %1709 = vadd.xlane.f32.xlu0 %v1708
    %v1710 = vpop.xlane.xlu0 %1709
    %v1711 = vsel %vm168, %v1663, 0.0
    %1712 = vadd.xlane.f32.xlu0 %v1711
    %v1713 = vpop.xlane.xlu0 %1712
    %v1714 = vsel %vm168, %v1664, 0.0
    %1715 = vadd.xlane.f32.xlu0 %v1714
    %v1716 = vpop.xlane.xlu0 %1715
    %v1717 = vsel %vm168, %v1665, 0.0
    %1718 = vadd.xlane.f32.xlu0 %v1717
    %v1719 = vpop.xlane.xlu0 %1718
    %v1720 = vsel %vm168, %v1666, 0.0
    %1721 = vadd.xlane.f32.xlu0 %v1720
    %v1722 = vpop.xlane.xlu0 %1721
    %v1723 = vsel %vm168, %v1667, 0.0
    %1724 = vadd.xlane.f32.xlu0 %v1723
    %v1725 = vpop.xlane.xlu0 %1724
    %v1726 = vsel %vm168, %v1668, 0.0
    %1727 = vadd.xlane.f32.xlu0 %v1726
    %v1728 = vpop.xlane.xlu0 %1727
    %v1729 = vsel %vm168, %v1669, 0.0
    %1730 = vadd.xlane.f32.xlu0 %v1729
    %v1731 = vpop.xlane.xlu0 %1730
    %v1732 = vsel %vm168, %v1670, 0.0
    %1733 = vadd.xlane.f32.xlu0 %v1732
    %v1734 = vpop.xlane.xlu0 %1733
    %v1735 = vsel %vm168, %v1671, 0.0
    %1736 = vadd.xlane.f32.xlu0 %v1735
    %v1737 = vpop.xlane.xlu0 %1736
    %v1738 = vsel %vm168, %v1672, 0.0
    %1739 = vadd.xlane.f32.xlu0 %v1738
    %v1740 = vpop.xlane.xlu0 %1739
    %v1741 = vsel %vm168, %v1673, 0.0
    %1742 = vadd.xlane.f32.xlu0 %v1741
    %v1743 = vpop.xlane.xlu0 %1742
    %v1744 = vsel %vm168, %v1674, 0.0
    %1745 = vadd.xlane.f32.xlu0 %v1744
    %v1746 = vpop.xlane.xlu0 %1745
    %v1771 = vperm.slane %v1677, %v807
    %v1772 = vperm.slane %v1680, %v809
    %v1773 = vsel %vm811, %v1772, %v1771
    %v1774 = vperm.slane %v1683, %v813
    %v1775 = vsel %vm815, %v1774, %v1773
    %v1776 = vperm.slane %v1686, %v807
    %v1777 = vperm.slane %v1689, %v809
    %v1778 = vsel %vm811, %v1777, %v1776
    %v1779 = vperm.slane %v1692, %v813
    %v1780 = vsel %vm815, %v1779, %v1778
    %v1781 = vperm.slane %v1695, %v807
    %v1782 = vperm.slane %v1698, %v809
    %v1783 = vsel %vm811, %v1782, %v1781
    %v1784 = vperm.slane %v1701, %v813
    %v1785 = vsel %vm815, %v1784, %v1783
    %v1786 = vperm.slane %v1704, %v807
    %v1787 = vperm.slane %v1707, %v809
    %v1788 = vsel %vm811, %v1787, %v1786
    %v1789 = vperm.slane %v1710, %v813
    %v1790 = vsel %vm815, %v1789, %v1788
    %v1791 = vperm.slane %v1713, %v807
    %v1792 = vperm.slane %v1716, %v809
    %v1793 = vsel %vm811, %v1792, %v1791
    %v1794 = vperm.slane %v1719, %v813
    %v1795 = vsel %vm815, %v1794, %v1793
    %v1796 = vperm.slane %v1722, %v807
    %v1797 = vperm.slane %v1725, %v809
    %v1798 = vsel %vm811, %v1797, %v1796
    %v1799 = vperm.slane %v1728, %v813
    %v1800 = vsel %vm815, %v1799, %v1798
    %v1801 = vperm.slane %v1731, %v807
    %v1802 = vperm.slane %v1734, %v809
    %v1803 = vsel %vm811, %v1802, %v1801
    %v1804 = vperm.slane %v1737, %v813
    %v1805 = vsel %vm815, %v1804, %v1803
    %v1806 = vperm.slane %v1740, %v807
    %v1807 = vperm.slane %v1743, %v809
    %v1808 = vsel %vm811, %v1807, %v1806
    %v1809 = vperm.slane %v1746, %v813
    %v1810 = vsel %vm815, %v1809, %v1808
    %v1811 = vsel %vm852, %v1780, %v1775
    %v1812 = vsel %vm854, %v1785, %v1811
    %v1813 = vsel %vm856, %v1790, %v1812
    %v1814 = vsel %vm858, %v1795, %v1813
    %v1815 = vsel %vm860, %v1800, %v1814
    %v1816 = vsel %vm862, %v1805, %v1815
    %v1817 = vsel %vm864, %v1810, %v1816
    %v1819 = vsel %vm1552, %v1817, -1e+30
    %v1820 = vsel %vm85, %v1819, -inf
    %1821 = vmax.xlane.f32.xlu0 %v1820
    %v1822 = vpop.xlane.xlu0 %1821
    %v1823 = vsub.f32 %v1819, %v1822
    %v1824 = vmul.f32 %v1823, 1.442695
    %v1825 = vpow.pop %v1824
    %v1826 = vsel %vm1552, %v1825, 0.0
    %v1827 = vsel %vm85, %v1826, 0.0
    %1828 = vadd.xlane.f32.xlu0 %v1827
    %v1829 = vpop.xlane.xlu0 %1828
    %v1830 = vrcp.pop %v1829
    %v1831 = vmul.f32 %v1829, %v1830
    %v1832 = vsub.f32 1.0, %v1831
    %v1833 = vmul.f32 %v1830, %v1832
    %v1834 = vadd.f32 %v1830, %v1833
    %vm1835 = vweird.f32 %v1829
    %vm1836 = vweird.f32 %v1830
    %vm1837 = vmor %vm1835, %vm1836
    %v1838 = vsel %vm1837, %v1830, %v1834
    %v1839 = vand.u32 2147483647, %v1829
    %vm1840 = vcmp.eq.f32.partialorder %v1839, 8.507059e+37
    %v1841 = vand.u32 %v1829, 2147483648
    %v1842 = vor.u32 1.1754944e-38, %v1841
    %v1843 = vsel %vm1840, %v1842, %v1838
    %v1844 = vmul.f32 %v1826, %v1843
    %v1846 = vsel %vm85, %v1844, 0
    %1848 = vmatpush.msra.mxu0 0.0
    %1849 = vmatpush.msra.mxu0 0.0
    %1850 = vmatpush.msra.mxu0 0.0
    %1851 = vmatpush.msra.mxu0 0.0
    %1852 = vmatpush.msra.mxu0 0.0
    %1853 = vmatpush.msra.mxu0 0.0
    %1854 = vmatpush.msra.mxu0 0.0
    %1855 = vmatpush.msra.mxu0 0.0
    %1856 = vmatpush.msra.mxu0 0.0
    %1857 = vmatpush.msra.mxu0 0.0
    %1858 = vmatpush.msra.mxu0 0.0
    %1859 = vmatpush.msra.mxu0 0.0
    %1860 = vmatpush.msra.mxu0 0.0
    %1861 = vmatpush.msra.mxu0 %v360
    %1862 = vmatpush.msra.mxu0 %v359
    %1863 = vmatpush.msra.mxu0 %v358
    %1864 = vmatmul.f32.gmra.mxu0 %v1846
    %v1865 = vpop.f32.mrf.mxu0
    %v1866 = vadd.f32 0.0, %v1865
    %1867 = vdwg.mxu0
    %v1869 = vsel %vm85, %v1650, 0
    %1871 = vmatpush.msra.mxu0 0.0
    %1872 = vmatpush.msra.mxu0 0.0
    %1873 = vmatpush.msra.mxu0 0.0
    %1874 = vmatpush.msra.mxu0 0.0
    %1875 = vmatpush.msra.mxu0 0.0
    %1876 = vmatpush.msra.mxu0 0.0
    %1877 = vmatpush.msra.mxu0 0.0
    %1878 = vmatpush.msra.mxu0 0.0
    %1879 = vmatpush.msra.mxu0 0.0
    %1880 = vmatpush.msra.mxu0 0.0
    %1881 = vmatpush.msra.mxu0 0.0
    %1882 = vmatpush.msra.mxu0 0.0
    %1883 = vmatpush.msra.mxu0 0.0
    %1884 = vmatpush.msra.mxu0 %v355
    %1885 = vmatpush.msra.mxu0 %v354
    %1886 = vmatpush.msra.mxu0 %v353
    %1887 = vmatmul.f32.gmra.mxu0 %v1869
    %v1888 = vpop.f32.mrf.mxu0
    %v1889 = vadd.f32 %v1866, %v1888
    %1890 = vdwg.mxu0
    %v1891 = vld [vmem:[%s1 + $0x58] sm:$0xff]
    %v1892 = vld [vmem:[%s1 + $0x40] sm:$0xff]
    %v1894 = vrot.slane %v346, 1
    %v1895 = vrot.slane %v346, 2
    %v1896 = vrot.slane %v346, 3
    %v1897 = vrot.slane %v346, 4
    %v1898 = vrot.slane %v346, 5
    %v1899 = vrot.slane %v346, 6
    %v1900 = vrot.slane %v346, 7
    %v1901 = vperm.slane %v346, 0
    %v1902 = vperm.slane %v1894, 0
    %v1903 = vperm.slane %v1895, 0
    %v1904 = vperm.slane %v1896, 0
    %v1905 = vperm.slane %v1897, 0
    %v1906 = vperm.slane %v1898, 0
    %v1907 = vperm.slane %v1899, 0
    %v1908 = vperm.slane %v1900, 0
    %v1917 = vadd.f32 %v312, %v1901
    %v1918 = vadd.f32 %v315, %v1901
    %v1919 = vadd.f32 %v318, %v1901
    %v1920 = vadd.f32 %v312, %v1902
    %v1921 = vadd.f32 %v315, %v1902
    %v1922 = vadd.f32 %v318, %v1902
    %v1923 = vadd.f32 %v312, %v1903
    %v1924 = vadd.f32 %v315, %v1903
    %v1925 = vadd.f32 %v318, %v1903
    %v1926 = vadd.f32 %v312, %v1904
    %v1927 = vadd.f32 %v315, %v1904
    %v1928 = vadd.f32 %v318, %v1904
    %v1929 = vadd.f32 %v312, %v1905
    %v1930 = vadd.f32 %v315, %v1905
    %v1931 = vadd.f32 %v318, %v1905
    %v1932 = vadd.f32 %v312, %v1906
    %v1933 = vadd.f32 %v315, %v1906
    %v1934 = vadd.f32 %v318, %v1906
    %v1935 = vadd.f32 %v312, %v1907
    %v1936 = vadd.f32 %v315, %v1907
    %v1937 = vadd.f32 %v318, %v1907
    %v1938 = vadd.f32 %v312, %v1908
    %v1939 = vadd.f32 %v315, %v1908
    %v1940 = vadd.f32 %v318, %v1908
    %v1941 = vperm.slane %v1891, 0
    %v1942 = vlaneseq
    %v1943 = vshrl.u32 %v1942, 7
    %1945 = vset.pattern.permute.xlu0 %v1943
    %1946 = vperm.xlu0 %1945, %v1941
    %v1947 = vpop.permute.xlu0 %1946
    %v1948 = vlaneseq
    %v1949 = vshrl.u32 %v1948, 7
    %v1950 = vadd.s32 %v1949, 8
    %1951 = vset.pattern.permute.xlu0 %v1950
    %1952 = vperm.xlu0 %1951, %v1941
    %v1953 = vpop.permute.xlu0 %1952
    %v1954 = vlaneseq
    %v1955 = vshrl.u32 %v1954, 7
    %v1956 = vadd.s32 %v1955, 16
    %1957 = vset.pattern.permute.xlu0 %v1956
    %1958 = vperm.xlu0 %1957, %v1941
    %v1959 = vpop.permute.xlu0 %1958
    %v1960 = vperm.slane %v1891, 1
    %v1961 = vlaneseq
    %v1962 = vshrl.u32 %v1961, 7
    %1964 = vset.pattern.permute.xlu0 %v1962
    %1965 = vperm.xlu0 %1964, %v1960
    %v1966 = vpop.permute.xlu0 %1965
    %v1967 = vlaneseq
    %v1968 = vshrl.u32 %v1967, 7
    %v1969 = vadd.s32 %v1968, 8
    %1970 = vset.pattern.permute.xlu0 %v1969
    %1971 = vperm.xlu0 %1970, %v1960
    %v1972 = vpop.permute.xlu0 %1971
    %v1973 = vlaneseq
    %v1974 = vshrl.u32 %v1973, 7
    %v1975 = vadd.s32 %v1974, 16
    %1976 = vset.pattern.permute.xlu0 %v1975
    %1977 = vperm.xlu0 %1976, %v1960
    %v1978 = vpop.permute.xlu0 %1977
    %v1979 = vperm.slane %v1891, 2
    %v1980 = vlaneseq
    %v1981 = vshrl.u32 %v1980, 7
    %1983 = vset.pattern.permute.xlu0 %v1981
    %1984 = vperm.xlu0 %1983, %v1979
    %v1985 = vpop.permute.xlu0 %1984
    %v1986 = vlaneseq
    %v1987 = vshrl.u32 %v1986, 7
    %v1988 = vadd.s32 %v1987, 8
    %1989 = vset.pattern.permute.xlu0 %v1988
    %1990 = vperm.xlu0 %1989, %v1979
    %v1991 = vpop.permute.xlu0 %1990
    %v1992 = vlaneseq
    %v1993 = vshrl.u32 %v1992, 7
    %v1994 = vadd.s32 %v1993, 16
    %1995 = vset.pattern.permute.xlu0 %v1994
    %1996 = vperm.xlu0 %1995, %v1979
    %v1997 = vpop.permute.xlu0 %1996
    %v1998 = vperm.slane %v1891, 3
    %v1999 = vlaneseq
    %v2000 = vshrl.u32 %v1999, 7
    %2002 = vset.pattern.permute.xlu0 %v2000
    %2003 = vperm.xlu0 %2002, %v1998
    %v2004 = vpop.permute.xlu0 %2003
    %v2005 = vlaneseq
    %v2006 = vshrl.u32 %v2005, 7
    %v2007 = vadd.s32 %v2006, 8
    %2008 = vset.pattern.permute.xlu0 %v2007
    %2009 = vperm.xlu0 %2008, %v1998
    %v2010 = vpop.permute.xlu0 %2009
    %v2011 = vlaneseq
    %v2012 = vshrl.u32 %v2011, 7
    %v2013 = vadd.s32 %v2012, 16
    %2014 = vset.pattern.permute.xlu0 %v2013
    %2015 = vperm.xlu0 %2014, %v1998
    %v2016 = vpop.permute.xlu0 %2015
    %v2017 = vperm.slane %v1891, 4
    %v2018 = vlaneseq
    %v2019 = vshrl.u32 %v2018, 7
    %2021 = vset.pattern.permute.xlu0 %v2019
    %2022 = vperm.xlu0 %2021, %v2017
    %v2023 = vpop.permute.xlu0 %2022
    %v2024 = vlaneseq
    %v2025 = vshrl.u32 %v2024, 7
    %v2026 = vadd.s32 %v2025, 8
    %2027 = vset.pattern.permute.xlu0 %v2026
    %2028 = vperm.xlu0 %2027, %v2017
    %v2029 = vpop.permute.xlu0 %2028
    %v2030 = vlaneseq
    %v2031 = vshrl.u32 %v2030, 7
    %v2032 = vadd.s32 %v2031, 16
    %2033 = vset.pattern.permute.xlu0 %v2032
    %2034 = vperm.xlu0 %2033, %v2017
    %v2035 = vpop.permute.xlu0 %2034
    %v2036 = vperm.slane %v1891, 5
    %v2037 = vlaneseq
    %v2038 = vshrl.u32 %v2037, 7
    %2040 = vset.pattern.permute.xlu0 %v2038
    %2041 = vperm.xlu0 %2040, %v2036
    %v2042 = vpop.permute.xlu0 %2041
    %v2043 = vlaneseq
    %v2044 = vshrl.u32 %v2043, 7
    %v2045 = vadd.s32 %v2044, 8
    %2046 = vset.pattern.permute.xlu0 %v2045
    %2047 = vperm.xlu0 %2046, %v2036
    %v2048 = vpop.permute.xlu0 %2047
    %v2049 = vlaneseq
    %v2050 = vshrl.u32 %v2049, 7
    %v2051 = vadd.s32 %v2050, 16
    %2052 = vset.pattern.permute.xlu0 %v2051
    %2053 = vperm.xlu0 %2052, %v2036
    %v2054 = vpop.permute.xlu0 %2053
    %v2055 = vperm.slane %v1891, 6
    %v2056 = vlaneseq
    %v2057 = vshrl.u32 %v2056, 7
    %2059 = vset.pattern.permute.xlu0 %v2057
    %2060 = vperm.xlu0 %2059, %v2055
    %v2061 = vpop.permute.xlu0 %2060
    %v2062 = vlaneseq
    %v2063 = vshrl.u32 %v2062, 7
    %v2064 = vadd.s32 %v2063, 8
    %2065 = vset.pattern.permute.xlu0 %v2064
    %2066 = vperm.xlu0 %2065, %v2055
    %v2067 = vpop.permute.xlu0 %2066
    %v2068 = vlaneseq
    %v2069 = vshrl.u32 %v2068, 7
    %v2070 = vadd.s32 %v2069, 16
    %2071 = vset.pattern.permute.xlu0 %v2070
    %2072 = vperm.xlu0 %2071, %v2055
    %v2073 = vpop.permute.xlu0 %2072
    %v2074 = vperm.slane %v1891, 7
    %v2075 = vlaneseq
    %v2076 = vshrl.u32 %v2075, 7
    %2078 = vset.pattern.permute.xlu0 %v2076
    %2079 = vperm.xlu0 %2078, %v2074
    %v2080 = vpop.permute.xlu0 %2079
    %v2081 = vlaneseq
    %v2082 = vshrl.u32 %v2081, 7
    %v2083 = vadd.s32 %v2082, 8
    %2084 = vset.pattern.permute.xlu0 %v2083
    %2085 = vperm.xlu0 %2084, %v2074
    %v2086 = vpop.permute.xlu0 %2085
    %v2087 = vlaneseq
    %v2088 = vshrl.u32 %v2087, 7
    %v2089 = vadd.s32 %v2088, 16
    %2090 = vset.pattern.permute.xlu0 %v2089
    %2091 = vperm.xlu0 %2090, %v2074
    %v2092 = vpop.permute.xlu0 %2091
    %v2093 = vmul.f32 %v1947, %v563
    %v2094 = vmul.f32 %v1953, %v563
    %v2095 = vmul.f32 %v1959, %v563
    %v2096 = vmul.f32 %v1966, %v563
    %v2097 = vmul.f32 %v1972, %v563
    %v2098 = vmul.f32 %v1978, %v563
    %v2099 = vmul.f32 %v1985, %v563
    %v2100 = vmul.f32 %v1991, %v563
    %v2101 = vmul.f32 %v1997, %v563
    %v2102 = vmul.f32 %v2004, %v563
    %v2103 = vmul.f32 %v2010, %v563
    %v2104 = vmul.f32 %v2016, %v563
    %v2105 = vmul.f32 %v2023, %v563
    %v2106 = vmul.f32 %v2029, %v563
    %v2107 = vmul.f32 %v2035, %v563
    %v2108 = vmul.f32 %v2042, %v563
    %v2109 = vmul.f32 %v2048, %v563
    %v2110 = vmul.f32 %v2054, %v563
    %v2111 = vmul.f32 %v2061, %v563
    %v2112 = vmul.f32 %v2067, %v563
    %v2113 = vmul.f32 %v2073, %v563
    %v2114 = vmul.f32 %v2080, %v563
    %v2115 = vmul.f32 %v2086, %v563
    %v2116 = vmul.f32 %v2092, %v563
    %v2117 = vadd.f32 %v1917, %v2093
    %v2118 = vadd.f32 %v1918, %v2094
    %v2119 = vadd.f32 %v1919, %v2095
    %v2120 = vadd.f32 %v1920, %v2096
    %v2121 = vadd.f32 %v1921, %v2097
    %v2122 = vadd.f32 %v1922, %v2098
    %v2123 = vadd.f32 %v1923, %v2099
    %v2124 = vadd.f32 %v1924, %v2100
    %v2125 = vadd.f32 %v1925, %v2101
    %v2126 = vadd.f32 %v1926, %v2102
    %v2127 = vadd.f32 %v1927, %v2103
    %v2128 = vadd.f32 %v1928, %v2104
    %v2129 = vadd.f32 %v1929, %v2105
    %v2130 = vadd.f32 %v1930, %v2106
    %v2131 = vadd.f32 %v1931, %v2107
    %v2132 = vadd.f32 %v1932, %v2108
    %v2133 = vadd.f32 %v1933, %v2109
    %v2134 = vadd.f32 %v1934, %v2110
    %v2135 = vadd.f32 %v1935, %v2111
    %v2136 = vadd.f32 %v1936, %v2112
    %v2137 = vadd.f32 %v1937, %v2113
    %v2138 = vadd.f32 %v1938, %v2114
    %v2139 = vadd.f32 %v1939, %v2115
    %v2140 = vadd.f32 %v1940, %v2116
    %vm2141 = vcmp.gt.f32.partialorder %v2117, 0.0
    %vm2142 = vcmp.gt.f32.partialorder %v2118, 0.0
    %vm2143 = vcmp.gt.f32.partialorder %v2119, 0.0
    %vm2144 = vcmp.gt.f32.partialorder %v2120, 0.0
    %vm2145 = vcmp.gt.f32.partialorder %v2121, 0.0
    %vm2146 = vcmp.gt.f32.partialorder %v2122, 0.0
    %vm2147 = vcmp.gt.f32.partialorder %v2123, 0.0
    %vm2148 = vcmp.gt.f32.partialorder %v2124, 0.0
    %vm2149 = vcmp.gt.f32.partialorder %v2125, 0.0
    %vm2150 = vcmp.gt.f32.partialorder %v2126, 0.0
    %vm2151 = vcmp.gt.f32.partialorder %v2127, 0.0
    %vm2152 = vcmp.gt.f32.partialorder %v2128, 0.0
    %vm2153 = vcmp.gt.f32.partialorder %v2129, 0.0
    %vm2154 = vcmp.gt.f32.partialorder %v2130, 0.0
    %vm2155 = vcmp.gt.f32.partialorder %v2131, 0.0
    %vm2156 = vcmp.gt.f32.partialorder %v2132, 0.0
    %vm2157 = vcmp.gt.f32.partialorder %v2133, 0.0
    %vm2158 = vcmp.gt.f32.partialorder %v2134, 0.0
    %vm2159 = vcmp.gt.f32.partialorder %v2135, 0.0
    %vm2160 = vcmp.gt.f32.partialorder %v2136, 0.0
    %vm2161 = vcmp.gt.f32.partialorder %v2137, 0.0
    %vm2162 = vcmp.gt.f32.partialorder %v2138, 0.0
    %vm2163 = vcmp.gt.f32.partialorder %v2139, 0.0
    %vm2164 = vcmp.gt.f32.partialorder %v2140, 0.0
    %v2165 = vmul.f32 %v2117, 0.2
    %v2166 = vmul.f32 %v2118, 0.2
    %v2167 = vmul.f32 %v2119, 0.2
    %v2168 = vmul.f32 %v2120, 0.2
    %v2169 = vmul.f32 %v2121, 0.2
    %v2170 = vmul.f32 %v2122, 0.2
    %v2171 = vmul.f32 %v2123, 0.2
    %v2172 = vmul.f32 %v2124, 0.2
    %v2173 = vmul.f32 %v2125, 0.2
    %v2174 = vmul.f32 %v2126, 0.2
    %v2175 = vmul.f32 %v2127, 0.2
    %v2176 = vmul.f32 %v2128, 0.2
    %v2177 = vmul.f32 %v2129, 0.2
    %v2178 = vmul.f32 %v2130, 0.2
    %v2179 = vmul.f32 %v2131, 0.2
    %v2180 = vmul.f32 %v2132, 0.2
    %v2181 = vmul.f32 %v2133, 0.2
    %v2182 = vmul.f32 %v2134, 0.2
    %v2183 = vmul.f32 %v2135, 0.2
    %v2184 = vmul.f32 %v2136, 0.2
    %v2185 = vmul.f32 %v2137, 0.2
    %v2186 = vmul.f32 %v2138, 0.2
    %v2187 = vmul.f32 %v2139, 0.2
    %v2188 = vmul.f32 %v2140, 0.2
    %v2189 = vsel %vm2141, %v2117, %v2165
    %v2190 = vsel %vm2142, %v2118, %v2166
    %v2191 = vsel %vm2143, %v2119, %v2167
    %v2192 = vsel %vm2144, %v2120, %v2168
    %v2193 = vsel %vm2145, %v2121, %v2169
    %v2194 = vsel %vm2146, %v2122, %v2170
    %v2195 = vsel %vm2147, %v2123, %v2171
    %v2196 = vsel %vm2148, %v2124, %v2172
    %v2197 = vsel %vm2149, %v2125, %v2173
    %v2198 = vsel %vm2150, %v2126, %v2174
    %v2199 = vsel %vm2151, %v2127, %v2175
    %v2200 = vsel %vm2152, %v2128, %v2176
    %v2201 = vsel %vm2153, %v2129, %v2177
    %v2202 = vsel %vm2154, %v2130, %v2178
    %v2203 = vsel %vm2155, %v2131, %v2179
    %v2204 = vsel %vm2156, %v2132, %v2180
    %v2205 = vsel %vm2157, %v2133, %v2181
    %v2206 = vsel %vm2158, %v2134, %v2182
    %v2207 = vsel %vm2159, %v2135, %v2183
    %v2208 = vsel %vm2160, %v2136, %v2184
    %v2209 = vsel %vm2161, %v2137, %v2185
    %v2210 = vsel %vm2162, %v2138, %v2186
    %v2211 = vsel %vm2163, %v2139, %v2187
    %v2212 = vsel %vm2164, %v2140, %v2188
    %v2213 = vmul.f32 %v2189, %v684
    %v2214 = vmul.f32 %v2190, %v684
    %v2215 = vmul.f32 %v2191, %v684
    %v2216 = vmul.f32 %v2192, %v684
    %v2217 = vmul.f32 %v2193, %v684
    %v2218 = vmul.f32 %v2194, %v684
    %v2219 = vmul.f32 %v2195, %v684
    %v2220 = vmul.f32 %v2196, %v684
    %v2221 = vmul.f32 %v2197, %v684
    %v2222 = vmul.f32 %v2198, %v684
    %v2223 = vmul.f32 %v2199, %v684
    %v2224 = vmul.f32 %v2200, %v684
    %v2225 = vmul.f32 %v2201, %v684
    %v2226 = vmul.f32 %v2202, %v684
    %v2227 = vmul.f32 %v2203, %v684
    %v2228 = vmul.f32 %v2204, %v684
    %v2229 = vmul.f32 %v2205, %v684
    %v2230 = vmul.f32 %v2206, %v684
    %v2231 = vmul.f32 %v2207, %v684
    %v2232 = vmul.f32 %v2208, %v684
    %v2233 = vmul.f32 %v2209, %v684
    %v2234 = vmul.f32 %v2210, %v684
    %v2235 = vmul.f32 %v2211, %v684
    %v2236 = vmul.f32 %v2212, %v684
    %v2237 = vsel %vm168, %v2213, 0.0
    %2238 = vadd.xlane.f32.xlu0 %v2237
    %v2239 = vpop.xlane.xlu0 %2238
    %v2240 = vsel %vm168, %v2214, 0.0
    %2241 = vadd.xlane.f32.xlu0 %v2240
    %v2242 = vpop.xlane.xlu0 %2241
    %v2243 = vsel %vm168, %v2215, 0.0
    %2244 = vadd.xlane.f32.xlu0 %v2243
    %v2245 = vpop.xlane.xlu0 %2244
    %v2246 = vsel %vm168, %v2216, 0.0
    %2247 = vadd.xlane.f32.xlu0 %v2246
    %v2248 = vpop.xlane.xlu0 %2247
    %v2249 = vsel %vm168, %v2217, 0.0
    %2250 = vadd.xlane.f32.xlu0 %v2249
    %v2251 = vpop.xlane.xlu0 %2250
    %v2252 = vsel %vm168, %v2218, 0.0
    %2253 = vadd.xlane.f32.xlu0 %v2252
    %v2254 = vpop.xlane.xlu0 %2253
    %v2255 = vsel %vm168, %v2219, 0.0
    %2256 = vadd.xlane.f32.xlu0 %v2255
    %v2257 = vpop.xlane.xlu0 %2256
    %v2258 = vsel %vm168, %v2220, 0.0
    %2259 = vadd.xlane.f32.xlu0 %v2258
    %v2260 = vpop.xlane.xlu0 %2259
    %v2261 = vsel %vm168, %v2221, 0.0
    %2262 = vadd.xlane.f32.xlu0 %v2261
    %v2263 = vpop.xlane.xlu0 %2262
    %v2264 = vsel %vm168, %v2222, 0.0
    %2265 = vadd.xlane.f32.xlu0 %v2264
    %v2266 = vpop.xlane.xlu0 %2265
    %v2267 = vsel %vm168, %v2223, 0.0
    %2268 = vadd.xlane.f32.xlu0 %v2267
    %v2269 = vpop.xlane.xlu0 %2268
    %v2270 = vsel %vm168, %v2224, 0.0
    %2271 = vadd.xlane.f32.xlu0 %v2270
    %v2272 = vpop.xlane.xlu0 %2271
    %v2273 = vsel %vm168, %v2225, 0.0
    %2274 = vadd.xlane.f32.xlu0 %v2273
    %v2275 = vpop.xlane.xlu0 %2274
    %v2276 = vsel %vm168, %v2226, 0.0
    %2277 = vadd.xlane.f32.xlu0 %v2276
    %v2278 = vpop.xlane.xlu0 %2277
    %v2279 = vsel %vm168, %v2227, 0.0
    %2280 = vadd.xlane.f32.xlu0 %v2279
    %v2281 = vpop.xlane.xlu0 %2280
    %v2282 = vsel %vm168, %v2228, 0.0
    %2283 = vadd.xlane.f32.xlu0 %v2282
    %v2284 = vpop.xlane.xlu0 %2283
    %v2285 = vsel %vm168, %v2229, 0.0
    %2286 = vadd.xlane.f32.xlu0 %v2285
    %v2287 = vpop.xlane.xlu0 %2286
    %v2288 = vsel %vm168, %v2230, 0.0
    %2289 = vadd.xlane.f32.xlu0 %v2288
    %v2290 = vpop.xlane.xlu0 %2289
    %v2291 = vsel %vm168, %v2231, 0.0
    %2292 = vadd.xlane.f32.xlu0 %v2291
    %v2293 = vpop.xlane.xlu0 %2292
    %v2294 = vsel %vm168, %v2232, 0.0
    %2295 = vadd.xlane.f32.xlu0 %v2294
    %v2296 = vpop.xlane.xlu0 %2295
    %v2297 = vsel %vm168, %v2233, 0.0
    %2298 = vadd.xlane.f32.xlu0 %v2297
    %v2299 = vpop.xlane.xlu0 %2298
    %v2300 = vsel %vm168, %v2234, 0.0
    %2301 = vadd.xlane.f32.xlu0 %v2300
    %v2302 = vpop.xlane.xlu0 %2301
    %v2303 = vsel %vm168, %v2235, 0.0
    %2304 = vadd.xlane.f32.xlu0 %v2303
    %v2305 = vpop.xlane.xlu0 %2304
    %v2306 = vsel %vm168, %v2236, 0.0
    %2307 = vadd.xlane.f32.xlu0 %v2306
    %v2308 = vpop.xlane.xlu0 %2307
    %vm2309 = vcmp.gt.f32.partialorder %v1892, 0.0
    %v2334 = vperm.slane %v2239, %v807
    %v2335 = vperm.slane %v2242, %v809
    %v2336 = vsel %vm811, %v2335, %v2334
    %v2337 = vperm.slane %v2245, %v813
    %v2338 = vsel %vm815, %v2337, %v2336
    %v2339 = vperm.slane %v2248, %v807
    %v2340 = vperm.slane %v2251, %v809
    %v2341 = vsel %vm811, %v2340, %v2339
    %v2342 = vperm.slane %v2254, %v813
    %v2343 = vsel %vm815, %v2342, %v2341
    %v2344 = vperm.slane %v2257, %v807
    %v2345 = vperm.slane %v2260, %v809
    %v2346 = vsel %vm811, %v2345, %v2344
    %v2347 = vperm.slane %v2263, %v813
    %v2348 = vsel %vm815, %v2347, %v2346
    %v2349 = vperm.slane %v2266, %v807
    %v2350 = vperm.slane %v2269, %v809
    %v2351 = vsel %vm811, %v2350, %v2349
    %v2352 = vperm.slane %v2272, %v813
    %v2353 = vsel %vm815, %v2352, %v2351
    %v2354 = vperm.slane %v2275, %v807
    %v2355 = vperm.slane %v2278, %v809
    %v2356 = vsel %vm811, %v2355, %v2354
    %v2357 = vperm.slane %v2281, %v813
    %v2358 = vsel %vm815, %v2357, %v2356
    %v2359 = vperm.slane %v2284, %v807
    %v2360 = vperm.slane %v2287, %v809
    %v2361 = vsel %vm811, %v2360, %v2359
    %v2362 = vperm.slane %v2290, %v813
    %v2363 = vsel %vm815, %v2362, %v2361
    %v2364 = vperm.slane %v2293, %v807
    %v2365 = vperm.slane %v2296, %v809
    %v2366 = vsel %vm811, %v2365, %v2364
    %v2367 = vperm.slane %v2299, %v813
    %v2368 = vsel %vm815, %v2367, %v2366
    %v2369 = vperm.slane %v2302, %v807
    %v2370 = vperm.slane %v2305, %v809
    %v2371 = vsel %vm811, %v2370, %v2369
    %v2372 = vperm.slane %v2308, %v813
    %v2373 = vsel %vm815, %v2372, %v2371
    %v2374 = vsel %vm852, %v2343, %v2338
    %v2375 = vsel %vm854, %v2348, %v2374
    %v2376 = vsel %vm856, %v2353, %v2375
    %v2377 = vsel %vm858, %v2358, %v2376
    %v2378 = vsel %vm860, %v2363, %v2377
    %v2379 = vsel %vm862, %v2368, %v2378
    %v2380 = vsel %vm864, %v2373, %v2379
    %v2382 = vsel %vm2309, %v2380, -1e+30
    %v2383 = vsel %vm85, %v2382, -inf
    %2384 = vmax.xlane.f32.xlu0 %v2383
    %v2385 = vpop.xlane.xlu0 %2384
    %v2386 = vsub.f32 %v2382, %v2385
    %v2387 = vmul.f32 %v2386, 1.442695
    %v2388 = vpow.pop %v2387
    %v2389 = vsel %vm2309, %v2388, 0.0
    %v2390 = vsel %vm85, %v2389, 0.0
    %2391 = vadd.xlane.f32.xlu0 %v2390
    %v2392 = vpop.xlane.xlu0 %2391
    %v2393 = vrcp.pop %v2392
    %v2394 = vmul.f32 %v2392, %v2393
    %v2395 = vsub.f32 1.0, %v2394
    %v2396 = vmul.f32 %v2393, %v2395
    %v2397 = vadd.f32 %v2393, %v2396
    %vm2398 = vweird.f32 %v2392
    %vm2399 = vweird.f32 %v2393
    %vm2400 = vmor %vm2398, %vm2399
    %v2401 = vsel %vm2400, %v2393, %v2397
    %v2402 = vand.u32 2147483647, %v2392
    %vm2403 = vcmp.eq.f32.partialorder %v2402, 8.507059e+37
    %v2404 = vand.u32 %v2392, 2147483648
    %v2405 = vor.u32 1.1754944e-38, %v2404
    %v2406 = vsel %vm2403, %v2405, %v2401
    %v2407 = vmul.f32 %v2389, %v2406
    %v2408 = vmul.f32 %v2189, %v893
    %v2409 = vmul.f32 %v2190, %v893
    %v2410 = vmul.f32 %v2191, %v893
    %v2411 = vmul.f32 %v2192, %v893
    %v2412 = vmul.f32 %v2193, %v893
    %v2413 = vmul.f32 %v2194, %v893
    %v2414 = vmul.f32 %v2195, %v893
    %v2415 = vmul.f32 %v2196, %v893
    %v2416 = vmul.f32 %v2197, %v893
    %v2417 = vmul.f32 %v2198, %v893
    %v2418 = vmul.f32 %v2199, %v893
    %v2419 = vmul.f32 %v2200, %v893
    %v2420 = vmul.f32 %v2201, %v893
    %v2421 = vmul.f32 %v2202, %v893
    %v2422 = vmul.f32 %v2203, %v893
    %v2423 = vmul.f32 %v2204, %v893
    %v2424 = vmul.f32 %v2205, %v893
    %v2425 = vmul.f32 %v2206, %v893
    %v2426 = vmul.f32 %v2207, %v893
    %v2427 = vmul.f32 %v2208, %v893
    %v2428 = vmul.f32 %v2209, %v893
    %v2429 = vmul.f32 %v2210, %v893
    %v2430 = vmul.f32 %v2211, %v893
    %v2431 = vmul.f32 %v2212, %v893
    %v2432 = vsel %vm168, %v2408, 0.0
    %2433 = vadd.xlane.f32.xlu0 %v2432
    %v2434 = vpop.xlane.xlu0 %2433
    %v2435 = vsel %vm168, %v2409, 0.0
    %2436 = vadd.xlane.f32.xlu0 %v2435
    %v2437 = vpop.xlane.xlu0 %2436
    %v2438 = vsel %vm168, %v2410, 0.0
    %2439 = vadd.xlane.f32.xlu0 %v2438
    %v2440 = vpop.xlane.xlu0 %2439
    %v2441 = vsel %vm168, %v2411, 0.0
    %2442 = vadd.xlane.f32.xlu0 %v2441
    %v2443 = vpop.xlane.xlu0 %2442
    %v2444 = vsel %vm168, %v2412, 0.0
    %2445 = vadd.xlane.f32.xlu0 %v2444
    %v2446 = vpop.xlane.xlu0 %2445
    %v2447 = vsel %vm168, %v2413, 0.0
    %2448 = vadd.xlane.f32.xlu0 %v2447
    %v2449 = vpop.xlane.xlu0 %2448
    %v2450 = vsel %vm168, %v2414, 0.0
    %2451 = vadd.xlane.f32.xlu0 %v2450
    %v2452 = vpop.xlane.xlu0 %2451
    %v2453 = vsel %vm168, %v2415, 0.0
    %2454 = vadd.xlane.f32.xlu0 %v2453
    %v2455 = vpop.xlane.xlu0 %2454
    %v2456 = vsel %vm168, %v2416, 0.0
    %2457 = vadd.xlane.f32.xlu0 %v2456
    %v2458 = vpop.xlane.xlu0 %2457
    %v2459 = vsel %vm168, %v2417, 0.0
    %2460 = vadd.xlane.f32.xlu0 %v2459
    %v2461 = vpop.xlane.xlu0 %2460
    %v2462 = vsel %vm168, %v2418, 0.0
    %2463 = vadd.xlane.f32.xlu0 %v2462
    %v2464 = vpop.xlane.xlu0 %2463
    %v2465 = vsel %vm168, %v2419, 0.0
    %2466 = vadd.xlane.f32.xlu0 %v2465
    %v2467 = vpop.xlane.xlu0 %2466
    %v2468 = vsel %vm168, %v2420, 0.0
    %2469 = vadd.xlane.f32.xlu0 %v2468
    %v2470 = vpop.xlane.xlu0 %2469
    %v2471 = vsel %vm168, %v2421, 0.0
    %2472 = vadd.xlane.f32.xlu0 %v2471
    %v2473 = vpop.xlane.xlu0 %2472
    %v2474 = vsel %vm168, %v2422, 0.0
    %2475 = vadd.xlane.f32.xlu0 %v2474
    %v2476 = vpop.xlane.xlu0 %2475
    %v2477 = vsel %vm168, %v2423, 0.0
    %2478 = vadd.xlane.f32.xlu0 %v2477
    %v2479 = vpop.xlane.xlu0 %2478
    %v2480 = vsel %vm168, %v2424, 0.0
    %2481 = vadd.xlane.f32.xlu0 %v2480
    %v2482 = vpop.xlane.xlu0 %2481
    %v2483 = vsel %vm168, %v2425, 0.0
    %2484 = vadd.xlane.f32.xlu0 %v2483
    %v2485 = vpop.xlane.xlu0 %2484
    %v2486 = vsel %vm168, %v2426, 0.0
    %2487 = vadd.xlane.f32.xlu0 %v2486
    %v2488 = vpop.xlane.xlu0 %2487
    %v2489 = vsel %vm168, %v2427, 0.0
    %2490 = vadd.xlane.f32.xlu0 %v2489
    %v2491 = vpop.xlane.xlu0 %2490
    %v2492 = vsel %vm168, %v2428, 0.0
    %2493 = vadd.xlane.f32.xlu0 %v2492
    %v2494 = vpop.xlane.xlu0 %2493
    %v2495 = vsel %vm168, %v2429, 0.0
    %2496 = vadd.xlane.f32.xlu0 %v2495
    %v2497 = vpop.xlane.xlu0 %2496
    %v2498 = vsel %vm168, %v2430, 0.0
    %2499 = vadd.xlane.f32.xlu0 %v2498
    %v2500 = vpop.xlane.xlu0 %2499
    %v2501 = vsel %vm168, %v2431, 0.0
    %2502 = vadd.xlane.f32.xlu0 %v2501
    %v2503 = vpop.xlane.xlu0 %2502
    %v2528 = vperm.slane %v2434, %v807
    %v2529 = vperm.slane %v2437, %v809
    %v2530 = vsel %vm811, %v2529, %v2528
    %v2531 = vperm.slane %v2440, %v813
    %v2532 = vsel %vm815, %v2531, %v2530
    %v2533 = vperm.slane %v2443, %v807
    %v2534 = vperm.slane %v2446, %v809
    %v2535 = vsel %vm811, %v2534, %v2533
    %v2536 = vperm.slane %v2449, %v813
    %v2537 = vsel %vm815, %v2536, %v2535
    %v2538 = vperm.slane %v2452, %v807
    %v2539 = vperm.slane %v2455, %v809
    %v2540 = vsel %vm811, %v2539, %v2538
    %v2541 = vperm.slane %v2458, %v813
    %v2542 = vsel %vm815, %v2541, %v2540
    %v2543 = vperm.slane %v2461, %v807
    %v2544 = vperm.slane %v2464, %v809
    %v2545 = vsel %vm811, %v2544, %v2543
    %v2546 = vperm.slane %v2467, %v813
    %v2547 = vsel %vm815, %v2546, %v2545
    %v2548 = vperm.slane %v2470, %v807
    %v2549 = vperm.slane %v2473, %v809
    %v2550 = vsel %vm811, %v2549, %v2548
    %v2551 = vperm.slane %v2476, %v813
    %v2552 = vsel %vm815, %v2551, %v2550
    %v2553 = vperm.slane %v2479, %v807
    %v2554 = vperm.slane %v2482, %v809
    %v2555 = vsel %vm811, %v2554, %v2553
    %v2556 = vperm.slane %v2485, %v813
    %v2557 = vsel %vm815, %v2556, %v2555
    %v2558 = vperm.slane %v2488, %v807
    %v2559 = vperm.slane %v2491, %v809
    %v2560 = vsel %vm811, %v2559, %v2558
    %v2561 = vperm.slane %v2494, %v813
    %v2562 = vsel %vm815, %v2561, %v2560
    %v2563 = vperm.slane %v2497, %v807
    %v2564 = vperm.slane %v2500, %v809
    %v2565 = vsel %vm811, %v2564, %v2563
    %v2566 = vperm.slane %v2503, %v813
    %v2567 = vsel %vm815, %v2566, %v2565
    %v2568 = vsel %vm852, %v2537, %v2532
    %v2569 = vsel %vm854, %v2542, %v2568
    %v2570 = vsel %vm856, %v2547, %v2569
    %v2571 = vsel %vm858, %v2552, %v2570
    %v2572 = vsel %vm860, %v2557, %v2571
    %v2573 = vsel %vm862, %v2562, %v2572
    %v2574 = vsel %vm864, %v2567, %v2573
    %v2576 = vsel %vm2309, %v2574, -1e+30
    %v2577 = vsel %vm85, %v2576, -inf
    %2578 = vmax.xlane.f32.xlu0 %v2577
    %v2579 = vpop.xlane.xlu0 %2578
    %v2580 = vsub.f32 %v2576, %v2579
    %v2581 = vmul.f32 %v2580, 1.442695
    %v2582 = vpow.pop %v2581
    %v2583 = vsel %vm2309, %v2582, 0.0
    %v2584 = vsel %vm85, %v2583, 0.0
    %2585 = vadd.xlane.f32.xlu0 %v2584
    %v2586 = vpop.xlane.xlu0 %2585
    %v2587 = vrcp.pop %v2586
    %v2588 = vmul.f32 %v2586, %v2587
    %v2589 = vsub.f32 1.0, %v2588
    %v2590 = vmul.f32 %v2587, %v2589
    %v2591 = vadd.f32 %v2587, %v2590
    %vm2592 = vweird.f32 %v2586
    %vm2593 = vweird.f32 %v2587
    %vm2594 = vmor %vm2592, %vm2593
    %v2595 = vsel %vm2594, %v2587, %v2591
    %v2596 = vand.u32 2147483647, %v2586
    %vm2597 = vcmp.eq.f32.partialorder %v2596, 8.507059e+37
    %v2598 = vand.u32 %v2586, 2147483648
    %v2599 = vor.u32 1.1754944e-38, %v2598
    %v2600 = vsel %vm2597, %v2599, %v2595
    %v2601 = vmul.f32 %v2583, %v2600
    %v2603 = vsel %vm85, %v2601, 0
    %2605 = vmatpush.msra.mxu0 0.0
    %2606 = vmatpush.msra.mxu0 0.0
    %2607 = vmatpush.msra.mxu0 0.0
    %2608 = vmatpush.msra.mxu0 0.0
    %2609 = vmatpush.msra.mxu0 0.0
    %2610 = vmatpush.msra.mxu0 0.0
    %2611 = vmatpush.msra.mxu0 0.0
    %2612 = vmatpush.msra.mxu0 0.0
    %2613 = vmatpush.msra.mxu0 0.0
    %2614 = vmatpush.msra.mxu0 0.0
    %2615 = vmatpush.msra.mxu0 0.0
    %2616 = vmatpush.msra.mxu0 0.0
    %2617 = vmatpush.msra.mxu0 0.0
    %2618 = vmatpush.msra.mxu0 %v360
    %2619 = vmatpush.msra.mxu0 %v359
    %2620 = vmatpush.msra.mxu0 %v358
    %2621 = vmatmul.f32.gmra.mxu0 %v2603
    %v2622 = vpop.f32.mrf.mxu0
    %v2623 = vadd.f32 0.0, %v2622
    %2624 = vdwg.mxu0
    %v2626 = vsel %vm85, %v2407, 0
    %2628 = vmatpush.msra.mxu0 0.0
    %2629 = vmatpush.msra.mxu0 0.0
    %2630 = vmatpush.msra.mxu0 0.0
    %2631 = vmatpush.msra.mxu0 0.0
    %2632 = vmatpush.msra.mxu0 0.0
    %2633 = vmatpush.msra.mxu0 0.0
    %2634 = vmatpush.msra.mxu0 0.0
    %2635 = vmatpush.msra.mxu0 0.0
    %2636 = vmatpush.msra.mxu0 0.0
    %2637 = vmatpush.msra.mxu0 0.0
    %2638 = vmatpush.msra.mxu0 0.0
    %2639 = vmatpush.msra.mxu0 0.0
    %2640 = vmatpush.msra.mxu0 0.0
    %2641 = vmatpush.msra.mxu0 %v355
    %2642 = vmatpush.msra.mxu0 %v354
    %2643 = vmatpush.msra.mxu0 %v353
    %2644 = vmatmul.f32.gmra.mxu0 %v2626
    %v2645 = vpop.f32.mrf.mxu0
    %v2646 = vadd.f32 %v2623, %v2645
    %2647 = vdwg.mxu0
    %v2648 = vld [vmem:[%s1 + $0xed] sm:$0x1]
    %v2649 = vperm.slane %v2648, 0
    %v2650 = vadd.f32 %v1132, %v2649
    %v2651 = vadd.f32 %v1889, %v2649
    %v2652 = vadd.f32 %v2646, %v2649
    %v2653 = vld [vmem:[%s1 + $0x60] sm:$0x3]
    %v2655 = vsel %vm85, %v2653, 0
    %2657 = vmatpush.msra.mxu0 0.0
    %2658 = vmatpush.msra.mxu0 0.0
    %2659 = vmatpush.msra.mxu0 0.0
    %2660 = vmatpush.msra.mxu0 0.0
    %2661 = vmatpush.msra.mxu0 0.0
    %2662 = vmatpush.msra.mxu0 0.0
    %2663 = vmatpush.msra.mxu0 0.0
    %2664 = vmatpush.msra.mxu0 0.0
    %2665 = vmatpush.msra.mxu0 0.0
    %2666 = vmatpush.msra.mxu0 0.0
    %2667 = vmatpush.msra.mxu0 0.0
    %2668 = vmatpush.msra.mxu0 0.0
    %2669 = vmatpush.msra.mxu0 0.0
    %2670 = vmatpush.msra.mxu0 %v289
    %2671 = vmatpush.msra.mxu0 %v288
    %2672 = vmatpush.msra.mxu0 %v287
    %2673 = vmatmul.f32.gmra.mxu0 %v2655
    %v2674 = vpop.f32.mrf.mxu0
    %v2675 = vadd.f32 0.0, %v2674
    %2676 = vdwg.mxu0
    %2677 = vmatpush.msra.mxu0 0.0
    %2678 = vmatpush.msra.mxu0 0.0
    %2679 = vmatpush.msra.mxu0 0.0
    %2680 = vmatpush.msra.mxu0 0.0
    %2681 = vmatpush.msra.mxu0 0.0
    %2682 = vmatpush.msra.mxu0 0.0
    %2683 = vmatpush.msra.mxu0 0.0
    %2684 = vmatpush.msra.mxu0 0.0
    %2685 = vmatpush.msra.mxu0 0.0
    %2686 = vmatpush.msra.mxu0 0.0
    %2687 = vmatpush.msra.mxu0 0.0
    %2688 = vmatpush.msra.mxu0 0.0
    %2689 = vmatpush.msra.mxu0 0.0
    %2690 = vmatpush.msra.mxu0 %v2652
    %2691 = vmatpush.msra.mxu0 %v2651
    %2692 = vmatpush.msra.mxu0 %v2650
    %2693 = vmatmul.f32.gmra.mxu0 %v2655
    %v2694 = vpop.f32.mrf.mxu0
    %v2695 = vadd.f32 0.0, %v2694
    %2696 = vdwg.mxu0
    %v2697 = vld [vmem:[%s1 + $0xa8] sm:$0xff]
    %v2698 = vld [vmem:[%s1 + $0xb0] sm:$0xff]
    %v2699 = vld [vmem:[%s1 + $0xb8] sm:$0xff]
    %v2700 = vld [vmem:[%s1 + $0xc0] sm:$0xff]
    %v2702 = vsel %vm168, %v2695, 0
    %2704 = vmatpush.msra.mxu0 0.0
    %2705 = vmatpush.msra.mxu0 0.0
    %2706 = vmatpush.msra.mxu0 0.0
    %2707 = vmatpush.msra.mxu0 0.0
    %2708 = vmatpush.msra.mxu0 0.0
    %2709 = vmatpush.msra.mxu0 0.0
    %2710 = vmatpush.msra.mxu0 0.0
    %2711 = vmatpush.msra.mxu0 0.0
    %2712 = vmatpush.msra.mxu0 0.0
    %2713 = vmatpush.msra.mxu0 0.0
    %2714 = vmatpush.msra.mxu0 0.0
    %2715 = vmatpush.msra.mxu0 0.0
    %2716 = vmatpush.msra.mxu0 0.0
    %2717 = vmatpush.msra.mxu0 0.0
    %2718 = vmatpush.msra.mxu0 %v2700
    %2719 = vmatpush.msra.mxu0 %v2699
    %2720 = vmatmul.f32.gmra.mxu0 %v2702
    %v2721 = vpop.f32.mrf.mxu0
    %v2722 = vadd.f32 0.0, %v2721
    %2723 = vdwg.mxu0
    %v2725 = vsel %vm168, %v2675, 0
    %2727 = vmatpush.msra.mxu0 0.0
    %2728 = vmatpush.msra.mxu0 0.0
    %2729 = vmatpush.msra.mxu0 0.0
    %2730 = vmatpush.msra.mxu0 0.0
    %2731 = vmatpush.msra.mxu0 0.0
    %2732 = vmatpush.msra.mxu0 0.0
    %2733 = vmatpush.msra.mxu0 0.0
    %2734 = vmatpush.msra.mxu0 0.0
    %2735 = vmatpush.msra.mxu0 0.0
    %2736 = vmatpush.msra.mxu0 0.0
    %2737 = vmatpush.msra.mxu0 0.0
    %2738 = vmatpush.msra.mxu0 0.0
    %2739 = vmatpush.msra.mxu0 0.0
    %2740 = vmatpush.msra.mxu0 0.0
    %2741 = vmatpush.msra.mxu0 %v2698
    %2742 = vmatpush.msra.mxu0 %v2697
    %2743 = vmatmul.f32.gmra.mxu0 %v2725
    %v2744 = vpop.f32.mrf.mxu0
    %v2745 = vadd.f32 %v2722, %v2744
    %2746 = vdwg.mxu0
    %v2747 = vld [vmem:[%s1 + $0xee] sm:$0x1]
    %v2748 = vperm.slane %v2747, 0
    %v2749 = vadd.f32 %v2745, %v2748
    %v2750 = vmax.f32 %v2749, 0.0
    %v2751 = vld [vmem:[%s1 + $0xc8] sm:$0xff]
    %v2752 = vld [vmem:[%s1 + $0xd0] sm:$0xff]
    %v2753 = vld [vmem:[%s1 + $0xd8] sm:$0xff]
    %v2754 = vld [vmem:[%s1 + $0xe0] sm:$0xff]
    %v2755 = vld [vmem:[%s1 + $0xef] sm:$0x1]
    %v2756 = vperm.slane %v2755, 0
    %vm2757 = vcmask 261120
    %v2759 = vsel %vm2757, %v2750, 0
    %2761 = vmatpush.msra.mxu0 0.0
    %2762 = vmatpush.msra.mxu0 0.0
    %2763 = vmatpush.msra.mxu0 0.0
    %2764 = vmatpush.msra.mxu0 0.0
    %2765 = vmatpush.msra.mxu0 0.0
    %2766 = vmatpush.msra.mxu0 0.0
    %2767 = vmatpush.msra.mxu0 0.0
    %2768 = vmatpush.msra.mxu0 0.0
    %2769 = vmatpush.msra.mxu0 0.0
    %2770 = vmatpush.msra.mxu0 0.0
    %2771 = vmatpush.msra.mxu0 0.0
    %2772 = vmatpush.msra.mxu0 0.0
    %2773 = vmatpush.msra.mxu0 %v2754
    %2774 = vmatpush.msra.mxu0 %v2753
    %2775 = vmatpush.msra.mxu0 %v2752
    %2776 = vmatpush.msra.mxu0 %v2751
    %2777 = vmatmul.f32.gmra.mxu0 %v2759
    %v2778 = vpop.f32.mrf.mxu0
    %v2779 = vadd.f32 %v2756, %v2778
    %2780 = vdwg.mxu0
    %vm2781 = vcmask 17408
    %2782 = vst.msk [vmem:[#allocation2] sm:$0x3] %vm2781, %v2779
    // Predicated region
    $region10: #{fused_forward.1} parent=1 // pred_check
      _
    $region11: #{fused_forward.1} parent=1 // pred_check_branch
      %2784 = sbr.rel (0) target = $region13
    $region12: #{fused_forward.1} parent=1 // pred_region
      %2786 = vsyncadd [#allocation3], 0
      %s2788 = sshll.u32 [#allocation2], 4
      %s2789 = int_to_ptr.vmem [resolvable:$true] %s2788
      %s2790 = sshll.u32 %s2, 4
      %s2791 = int_to_ptr.hbm [resolvable:$true] %s2790
      %2793 = dma.vmem_to_hbm [thread:$0]  %s2789, 32, %s2791, [#allocation3]
    $region13: #{fused_forward.1} parent=1 // pred_fallthru
      _
    // Predicated region
    $region14: #{fused_forward.1} parent=1 // pred_check
      _
    $region15: #{fused_forward.1} parent=1 // pred_check_branch
      %2795 = sbr.rel (0) target = $region17
    $region16: #{fused_forward.1} parent=1 // pred_region
      %2797 = dma.done [#allocation3], 32
    $region17: #{fused_forward.1} parent=1 // pred_fallthru
      _
    %2798 = vsyncpa [#allocation3], 1

</llo_original>
